<compile_context>
chip_gen: v5e
topology: v5e:2x2
jax: 0.10.0
libtpu: 0.0.40
codegen_flags: <defaults>
</compile_context>

<pallas_src>
import jax
import jax.numpy as jnp
from jax.experimental import pallas as pl
from jax.experimental.pallas import tpu as pltpu

H1 = 400          # logical hidden 1
H2 = 300          # logical hidden 2
H1_PAD = 512      # 400 -> next multiple of 128
H2_PAD = 384      # 300 -> next multiple of 128 (keep at 384 for v5e!)
LANE = 128
SUBLANE = 8
TB_CAP = 1024     # batch-tile cap (review: 1024-2048; 1024 fits v5e scoped VMEM)


def _round_up(x, m):
    return (x + m - 1) // m * m


def _critic_kernel(x_ref,
                   w1_ref, b1_ref,
                   w2a_ref, w2b_ref, b2_ref,
                   w3_ref, b3_ref,
                   out_ref):
    # x holds [state | action | zero pad] packed along lanes (bf16).
    x = x_ref[...]                                               # (tb, IN_PAD)

    # Layer 1: Linear(n_states, 400) + ReLU at padded width 512.
    # W1's action/pad rows and pad columns are exactly zero, so the action
    # lanes of x contribute nothing and h1's lanes >= 400 stay zero after ReLU.
    h1 = jnp.dot(x, w1_ref[...],
                 preferred_element_type=jnp.float32) + b1_ref[...]
    h1 = jnp.maximum(h1, 0.0).astype(jnp.bfloat16)               # (tb, 512)

    # Layer 2: concat([h1, action]) @ W2 realized as two matmuls:
    #   h1 @ W2a   (rows >= 400 of W2a are zero)
    # + x  @ W2b   (state/pad rows of W2b are zero -> only the action lanes act)
    h2 = (jnp.dot(h1, w2a_ref[...], preferred_element_type=jnp.float32)
          + jnp.dot(x, w2b_ref[...], preferred_element_type=jnp.float32)
          + b2_ref[...])
    h2 = jnp.maximum(h2, 0.0)                                    # (tb, 384) f32

    # Layer 3: Linear(300, 1) as VPU multiply + lane reduction (MXU stays free;
    # w3's padded lanes are zero so h2's padded lanes don't pollute the sum).
    q = jnp.sum(h2 * w3_ref[...], axis=-1, keepdims=True) + b3_ref[...]
    out_ref[...] = q.astype(out_ref.dtype)


@jax.jit
def critic_forward(state, action, prepared):
    """state: (B, n_states) f32, action: (B, n_actions) f32 -> (B, 1) f32."""
    w1p, b1p, w2ap, w2bp, b2p, w3p, b3p = prepared
    B, n_states = state.shape
    n_actions = action.shape[1]
    in_w = n_states + n_actions
    in_pad = w1p.shape[0]                       # round_up(n_states+n_actions, 128)

    # Batch tile: target ceil(B/2) rows (>= 2 grid steps for v7x megacore when
    # B > 8), rounded to the sublane, capped at TB_CAP.
    tb = min(TB_CAP, _round_up(max(-(-B // 2), 1), SUBLANE))
    b_pad = _round_up(B, tb)

    # Single concatenate + pad: the only wrapper-side activation write.
    x = jnp.concatenate([state, action], axis=1).astype(jnp.bfloat16)
    x = jnp.pad(x, ((0, b_pad - B), (0, in_pad - in_w)))

    grid = (b_pad // tb,)
    out = pl.pallas_call(
        _critic_kernel,
        out_shape=jax.ShapeDtypeStruct((b_pad, 1), jnp.float32),
        grid=grid,
        in_specs=[
            pl.BlockSpec((tb, in_pad), lambda i: (i, 0)),        # packed [state|action]
            pl.BlockSpec((in_pad, H1_PAD), lambda i: (0, 0)),    # W1 (VMEM resident)
            pl.BlockSpec((1, H1_PAD), lambda i: (0, 0)),         # b1
            pl.BlockSpec((H1_PAD, H2_PAD), lambda i: (0, 0)),    # W2a (h1 part)
            pl.BlockSpec((in_pad, H2_PAD), lambda i: (0, 0)),    # W2b (action part)
            pl.BlockSpec((1, H2_PAD), lambda i: (0, 0)),         # b2
            pl.BlockSpec((1, H2_PAD), lambda i: (0, 0)),         # w3 row
            pl.BlockSpec((1, 1), lambda i: (0, 0)),              # b3
        ],
        out_specs=pl.BlockSpec((tb, 1), lambda i: (i, 0)),
        compiler_params=pltpu.CompilerParams(
            dimension_semantics=("parallel",)),
    )(x, w1p, b1p, w2ap, w2bp, b2p, w3p, b3p)
    # NOTE: rows >= B are padded-batch garbage; slice BEFORE any reduction.
    return out[:B]


def init_params(key, n_states, n_actions, h1=H1, h2=H2):
    """Mirrors the PyTorch init. Weights stored (in_features, out_features).

    Layer 1 & 2 weights: U(-1/sqrt(out_features), +1/sqrt(out_features))
    (PyTorch's m.weight.size()[0] is out_features).
    Final layer weight:  U(-3e-4, 3e-4).
    Biases keep PyTorch's default nn.Linear init: U(-1/sqrt(in_features), ...).
    """
    ks = jax.random.split(key, 6)
    inv = lambda f: 1.0 / (float(f) ** 0.5)

    w1 = jax.random.uniform(ks[0], (n_states, h1), jnp.float32, -inv(h1), inv(h1))
    b1 = jax.random.uniform(ks[1], (1, h1), jnp.float32,
                            -inv(n_states), inv(n_states))
    w2 = jax.random.uniform(ks[2], (h1 + n_actions, h2), jnp.float32,
                            -inv(h2), inv(h2))
    b2 = jax.random.uniform(ks[3], (1, h2), jnp.float32,
                            -inv(h1 + n_actions), inv(h1 + n_actions))
    w3 = jax.random.uniform(ks[4], (h2, 1), jnp.float32, -3e-4, 3e-4)
    b3 = jax.random.uniform(ks[5], (1, 1), jnp.float32, -inv(h2), inv(h2))
    return (w1, b1, w2, b2, w3, b3)


def prepare_params(params, n_states, n_actions):
    """One-time padding / bf16 cast into the kernel's packed, lane-aligned layout.

    CORRECTNESS INVARIANT (do not break): every padded row/lane below must be
    exactly zero — W1's action/pad rows and pad columns, W2a's rows >= 400,
    W2b's state/pad rows, and the padded lanes of b1/b2/w3.  ReLU(0)=0 keeps
    the spare lanes zero through the network; any non-zero init, noise, or
    dropout applied to these padded regions would silently corrupt the output.
    """
    w1, b1, w2, b2, w3, b3 = params
    in_w = n_states + n_actions
    in_pad = _round_up(in_w, LANE)
    assert w1.shape == (n_states, H1) and w2.shape == (H1 + n_actions, H2)

    w1p = jnp.zeros((in_pad, H1_PAD), jnp.float32).at[:n_states, :H1].set(w1)
    b1p = jnp.zeros((1, H1_PAD), jnp.float32).at[:, :H1].set(b1)

    # Split layer-2 weight: W2a acts on h1 (first 400 rows of w2), W2b acts on
    # the action lanes of the packed input (last n_actions rows of w2).
    w2a = jnp.zeros((H1_PAD, H2_PAD), jnp.float32).at[:H1, :H2].set(w2[:H1])
    w2b = jnp.zeros((in_pad, H2_PAD), jnp.float32).at[
        n_states:n_states + n_actions, :H2].set(w2[H1:])
    b2p = jnp.zeros((1, H2_PAD), jnp.float32).at[:, :H2].set(b2)

    w3p = jnp.zeros((1, H2_PAD), jnp.float32).at[:, :H2].set(w3.reshape(1, H2))
    b3p = b3.reshape(1, 1).astype(jnp.float32)

    return (w1p.astype(jnp.bfloat16), b1p,
            w2a.astype(jnp.bfloat16), w2b.astype(jnp.bfloat16), b2p,
            w3p, b3p)


def critic_reference(state, action, params):
    """Pure-JAX f32 reference (mirrors the PyTorch forward exactly)."""
    w1, b1, w2, b2, w3, b3 = params
    h1 = jnp.maximum(state @ w1 + b1, 0.0)
    cat = jnp.concatenate([h1, action], axis=1)
    h2 = jnp.maximum(cat @ w2 + b2, 0.0)
    return h2 @ w3 + b3


if __name__ == "__main__":
    # B=24 exercises the multi-tile grid path (tb=16, b_pad=32, grid=(2,)).
    B, n_states, n_actions = 24, 16, 4

    key = jax.random.PRNGKey(0)
    k_state, k_action, k_params = jax.random.split(key, 3)

    state = jax.random.normal(k_state, (B, n_states), dtype=jnp.float32)
    action = jax.random.normal(k_action, (B, n_actions), dtype=jnp.float32)

    params = init_params(k_params, n_states, n_actions)
    prepared = prepare_params(params, n_states, n_actions)

    out = jax.block_until_ready(critic_forward(state, action, prepared))
    ref = critic_reference(state, action, params)

    assert out.shape == (B, 1), out.shape
    # bf16 weights/activations with f32 accumulation -> slightly looser tolerance.
    assert jnp.allclose(out, ref, atol=3e-3, rtol=2e-2), (out, ref)

    print("KERNEL_OK")
</pallas_src>

<mosaic_0001>
module attributes {stable_mosaic.version = 11 : i64} {
  func.func @_critic_kernel(%arg0: i32, %arg1: memref<16x128xbf16, #tpu.memory_space<vmem>>, %arg2: memref<128x512xbf16, #tpu.memory_space<vmem>>, %arg3: memref<1x512xf32, #tpu.memory_space<vmem>>, %arg4: memref<512x384xbf16, #tpu.memory_space<vmem>>, %arg5: memref<128x384xbf16, #tpu.memory_space<vmem>>, %arg6: memref<1x384xf32, #tpu.memory_space<vmem>>, %arg7: memref<1x384xf32, #tpu.memory_space<vmem>>, %arg8: memref<1x1xf32, #tpu.memory_space<vmem>>, %arg9: memref<16x1xf32, #tpu.memory_space<vmem>>) attributes {dimension_semantics = [#tpu.dimension_semantics<parallel>], iteration_bounds = array<i64: 2>, scalar_prefetch = 0 : i64, scratch_operands = 0 : i64, tpu.core_type = #tpu.core_type<tc>, window_params = [{transform_indices = @transform_0, window_bounds = array<i64: 16, 128>}, {pipeline_mode = #tpu.pipeline_mode<synchronous>, transform_indices = @transform_1, window_bounds = array<i64: 128, 512>}, {pipeline_mode = #tpu.pipeline_mode<synchronous>, transform_indices = @transform_2, window_bounds = array<i64: 1, 512>}, {pipeline_mode = #tpu.pipeline_mode<synchronous>, transform_indices = @transform_3, window_bounds = array<i64: 512, 384>}, {pipeline_mode = #tpu.pipeline_mode<synchronous>, transform_indices = @transform_4, window_bounds = array<i64: 128, 384>}, {pipeline_mode = #tpu.pipeline_mode<synchronous>, transform_indices = @transform_5, window_bounds = array<i64: 1, 384>}, {pipeline_mode = #tpu.pipeline_mode<synchronous>, transform_indices = @transform_6, window_bounds = array<i64: 1, 384>}, {pipeline_mode = #tpu.pipeline_mode<synchronous>, transform_indices = @transform_7, window_bounds = array<i64: 1, 1>}, {transform_indices = @transform_8, window_bounds = array<i64: 16, 1>}]} {
    %c0 = arith.constant 0 : index
    %c0_0 = arith.constant 0 : index
    %0 = vector.load %arg1[%c0, %c0_0] : memref<16x128xbf16, #tpu.memory_space<vmem>>, vector<16x128xbf16>
    %c0_1 = arith.constant 0 : index
    %c0_2 = arith.constant 0 : index
    %1 = vector.load %arg2[%c0_1, %c0_2] : memref<128x512xbf16, #tpu.memory_space<vmem>>, vector<128x512xbf16>
    %cst = arith.constant dense<0.000000e+00> : vector<16x512xf32>
    %2 = tpu.matmul %0, %1, %cst {dimension_numbers = #tpu.dot_dimension_numbers<[1], [0], [0], [1], [0, 0, 1, 1], [], []>} : vector<16x128xbf16>, vector<128x512xbf16>, vector<16x512xf32> -> vector<16x512xf32>
    %c0_3 = arith.constant 0 : index
    %c0_4 = arith.constant 0 : index
    %3 = vector.load %arg3[%c0_3, %c0_4] : memref<1x512xf32, #tpu.memory_space<vmem>>, vector<1x512xf32>
    %4 = vector.broadcast %3 : vector<1x512xf32> to vector<16x512xf32>
    %5 = arith.addf %2, %4 : vector<16x512xf32>
    %cst_5 = arith.constant 0.000000e+00 : f32
    %6 = vector.broadcast %cst_5 : f32 to vector<16x512xf32>
    %7 = arith.maximumf %5, %6 : vector<16x512xf32>
    %8 = arith.truncf %7 : vector<16x512xf32> to vector<16x512xbf16>
    %c0_6 = arith.constant 0 : index
    %c0_7 = arith.constant 0 : index
    %9 = vector.load %arg4[%c0_6, %c0_7] : memref<512x384xbf16, #tpu.memory_space<vmem>>, vector<512x384xbf16>
    %cst_8 = arith.constant dense<0.000000e+00> : vector<16x384xf32>
    %10 = tpu.matmul %8, %9, %cst_8 {dimension_numbers = #tpu.dot_dimension_numbers<[1], [0], [0], [1], [0, 0, 1, 1], [], []>} : vector<16x512xbf16>, vector<512x384xbf16>, vector<16x384xf32> -> vector<16x384xf32>
    %c0_9 = arith.constant 0 : index
    %c0_10 = arith.constant 0 : index
    %11 = vector.load %arg5[%c0_9, %c0_10] : memref<128x384xbf16, #tpu.memory_space<vmem>>, vector<128x384xbf16>
    %cst_11 = arith.constant dense<0.000000e+00> : vector<16x384xf32>
    %12 = tpu.matmul %0, %11, %cst_11 {dimension_numbers = #tpu.dot_dimension_numbers<[1], [0], [0], [1], [0, 0, 1, 1], [], []>} : vector<16x128xbf16>, vector<128x384xbf16>, vector<16x384xf32> -> vector<16x384xf32>
    %13 = arith.addf %10, %12 : vector<16x384xf32>
    %c0_12 = arith.constant 0 : index
    %c0_13 = arith.constant 0 : index
    %14 = vector.load %arg6[%c0_12, %c0_13] : memref<1x384xf32, #tpu.memory_space<vmem>>, vector<1x384xf32>
    %15 = vector.broadcast %14 : vector<1x384xf32> to vector<16x384xf32>
    %16 = arith.addf %13, %15 : vector<16x384xf32>
    %cst_14 = arith.constant 0.000000e+00 : f32
    %17 = vector.broadcast %cst_14 : f32 to vector<16x384xf32>
    %18 = arith.maximumf %16, %17 : vector<16x384xf32>
    %c0_15 = arith.constant 0 : index
    %c0_16 = arith.constant 0 : index
    %19 = vector.load %arg7[%c0_15, %c0_16] : memref<1x384xf32, #tpu.memory_space<vmem>>, vector<1x384xf32>
    %20 = vector.broadcast %19 : vector<1x384xf32> to vector<16x384xf32>
    %21 = arith.mulf %18, %20 : vector<16x384xf32>
    %cst_17 = arith.constant dense<0.000000e+00> : vector<16xf32>
    %22 = vector.multi_reduction <add>, %21, %cst_17 [1] : vector<16x384xf32> to vector<16xf32>
    %23 = vector.shape_cast %22 : vector<16xf32> to vector<16x1xf32>
    %c0_18 = arith.constant 0 : index
    %c0_19 = arith.constant 0 : index
    %24 = vector.load %arg8[%c0_18, %c0_19] : memref<1x1xf32, #tpu.memory_space<vmem>>, vector<1x1xf32>
    %25 = vector.broadcast %24 : vector<1x1xf32> to vector<16x1xf32>
    %26 = arith.addf %23, %25 : vector<16x1xf32>
    %c0_20 = arith.constant 0 : index
    %c0_21 = arith.constant 0 : index
    %27 = vector.load %arg9[%c0_20, %c0_21] : memref<16x1xf32, #tpu.memory_space<vmem>>, vector<16x1xf32>
    tpu.vector_store %arg9[%c0_20, %c0_21], %26 {strides = array<i32>} : memref<16x1xf32, #tpu.memory_space<vmem>>, vector<16x1xf32>,
    return
  }
  func.func @transform_0(%arg0: i32) -> (i32, i32) {
    %c0_i32 = arith.constant 0 : i32
    %c0_i32_0 = arith.constant 0 : i32
    return %arg0, %c0_i32 : i32, i32
  }
  func.func @transform_1(%arg0: i32) -> (i32, i32) {
    %c0_i32 = arith.constant 0 : i32
    %c0_i32_0 = arith.constant 0 : i32
    %c0_i32_1 = arith.constant 0 : i32
    return %c0_i32, %c0_i32_0 : i32, i32
  }
  func.func @transform_2(%arg0: i32) -> (i32, i32) {
    %c0_i32 = arith.constant 0 : i32
    %c0_i32_0 = arith.constant 0 : i32
    %c0_i32_1 = arith.constant 0 : i32
    return %c0_i32, %c0_i32_0 : i32, i32
  }
  func.func @transform_3(%arg0: i32) -> (i32, i32) {
    %c0_i32 = arith.constant 0 : i32
    %c0_i32_0 = arith.constant 0 : i32
    %c0_i32_1 = arith.constant 0 : i32
    return %c0_i32, %c0_i32_0 : i32, i32
  }
  func.func @transform_4(%arg0: i32) -> (i32, i32) {
    %c0_i32 = arith.constant 0 : i32
    %c0_i32_0 = arith.constant 0 : i32
    %c0_i32_1 = arith.constant 0 : i32
    return %c0_i32, %c0_i32_0 : i32, i32
  }
  func.func @transform_5(%arg0: i32) -> (i32, i32) {
    %c0_i32 = arith.constant 0 : i32
    %c0_i32_0 = arith.constant 0 : i32
    %c0_i32_1 = arith.constant 0 : i32
    return %c0_i32, %c0_i32_0 : i32, i32
  }
  func.func @transform_6(%arg0: i32) -> (i32, i32) {
    %c0_i32 = arith.constant 0 : i32
    %c0_i32_0 = arith.constant 0 : i32
    %c0_i32_1 = arith.constant 0 : i32
    return %c0_i32, %c0_i32_0 : i32, i32
  }
  func.func @transform_7(%arg0: i32) -> (i32, i32) {
    %c0_i32 = arith.constant 0 : i32
    %c0_i32_0 = arith.constant 0 : i32
    %c0_i32_1 = arith.constant 0 : i32
    return %c0_i32, %c0_i32_0 : i32, i32
  }
  func.func @transform_8(%arg0: i32) -> (i32, i32) {
    %c0_i32 = arith.constant 0 : i32
    %c0_i32_0 = arith.constant 0 : i32
    return %arg0, %c0_i32 : i32, i32
  }
}

</mosaic_0001>

<llo_original>
// kernel: critic_forward.1
$region0: #{critic_forward.1}
  #allocation0 [shape = 'u32[]', space=smem, size = 0x4, offset = 0x4, fixed_abs, tag = 'smem constant byte address 0x4 - core index']
  #allocation1 [shape = 'u32[72,128]{1,0:T(1,128)}', space=vmem, size = 0x9000, scoped, tag = 'internal scratch']
  #allocation2 [shape = 'f32[1,1]{1,0:T(1,128)S(1)}', space=vmem, size = 0x200, scoped, tag = 'scoped memory for critic_forward.1']
  %s0 = inlined_call_operand.vmem [shape: bf16[32,128], index: 0, kind: input, shape index: {}]
  %s1 = inlined_call_operand.hbm [shape: bf16[128,512], index: 1, kind: input, shape index: {}]
  %s2 = inlined_call_operand.vmem [shape: f32[1,512], index: 2, kind: input, shape index: {}]
  %s3 = inlined_call_operand.hbm [shape: bf16[512,384], index: 3, kind: input, shape index: {}]
  %s4 = inlined_call_operand.hbm [shape: bf16[128,384], index: 4, kind: input, shape index: {}]
  %s5 = inlined_call_operand.vmem [shape: f32[1,384], index: 5, kind: input, shape index: {}]
  %s6 = inlined_call_operand.vmem [shape: f32[1,384], index: 6, kind: input, shape index: {}]
  %s7 = inlined_call_operand.<no memory space> [shape: f32[1,1], index: 7, kind: input, shape index: {}]
  %s8 = inlined_call_operand.vmem [shape: f32[32,1], index: 8, kind: output, shape index: {}]
  %s9 = sld [smem:[#allocation0]]
  $region77: #{critic_forward.1} parent=0
    _
  %s11 = ssub.s32 1, %s9
  %s12 = scalar_select 0, %s11, %s9
  %v13 = vstv %s7
  %14 = vst [vmem:[#allocation2] sm:$0x1] %v13
  $region1: #{critic_forward.1} parent=0
    #allocation3 [shape = 'u8[131072]{0}', space=vmem, size = 0x20000, scoped, tag = 'input window, operand 1, single buffered']
    #allocation4 [shape = 's32[2]{0}', space=sflag, size = 0x8, scoped, tag = 'scoped memory for critic_forward.1']
    #allocation5 [shape = 'u8[393216]{0}', space=vmem, size = 0x60000, scoped, tag = 'input window, operand 3, single buffered']
    #allocation6 [shape = 's32[1]{0}', space=sflag, size = 0x4, scoped, tag = 'scoped memory for critic_forward.1']
    #allocation7 [shape = 'u8[98304]{0}', space=vmem, size = 0x18000, scoped, tag = 'input window, operand 4, single buffered']
    %15 = vsyncpa [#allocation4], 0
    %16 = vsyncpa [#allocation6], 0
    loop: start=0, step=1, limit=4
    $region2: #{critic_forward.1} parent=1 // loop_pre_header
      _
    $region3: #{critic_forward.1} parent=1 // loop_header
      %s18 = sphi 0, %s22
      %p19 = scmp.ge.s32.totalorder %s18, 4
      %s28 = sphi 0, %s30
      %s31 = sphi 0, %s28
      %s32 = sphi 0, %s31
      %s48 = sphi 0, %s32
      %s52 = sphi 0, %s52
      %s54 = sphi 0, %s52
      %s55 = sphi 0, %s54
      %s69 = sphi 0, %s55
      %s73 = sphi 0, %s73
      %s75 = sphi 0, %s73
      %s76 = sphi 0, %s75
      %s90 = sphi 0, %s76
      %s94 = sphi 0, %s94
      %s96 = sphi 0, %s94
      %s97 = sphi 0, %s96
      %s111 = sphi 0, %s97
      %s115 = sphi 0, %s115
      %s117 = sphi 0, %s115
      %s118 = sphi 0, %s117
      %s132 = sphi 0, %s118
      %s136 = sphi 0, %s136
      %s138 = sphi 0, %s136
      %s139 = sphi 0, %s138
      %s153 = sphi 0, %s139
      %s157 = sphi 0, %s157
      %s159 = sphi 0, %s157
      %s160 = sphi 0, %s159
      %s174 = sphi 0, %s160
      %s178 = sphi 0, %s178
      %s180 = sphi 0, %s178
      %s181 = sphi 0, %s180
      %s195 = sphi 0, %s181
      %s201 = sphi 0, %s203
      %s204 = sphi 0, %s201
      %s205 = sphi 0, %s204
      %s221 = sphi 0, %s205
    $region4: #{critic_forward.1} parent=1 // loop_header_branch
      %21 = sbr.rel (%p19) target = $region8
    $region5: #{critic_forward.1} parent=1 // loop_body
      %s23 = ssub.s32 %s18, 1
      %s24 = ssub.s32 %s18, 2
      %s25 = sadd.s32 %s18, 1
      %s26 = ssub.s32 %s18, %s25
      %p27 = scmp.eq.s32.totalorder %s26, 0
      %s29 = sadd.s32 %s28, 1
      %s30 = scalar_select %p27, %s28, %s29
      %p33 = pneg %p27
      %p34 = scmp.eq.s32.totalorder %s18, 1
      %p35 = por %p33, %p34
      %p36 = scmp.ne.s32.totalorder %s28, %s31
      %p37 = scmp.eq.s32.totalorder %s18, 0
      %p38 = por %p36, %p37
      %p39 = scmp.ne.s32.totalorder %s28, %s31
      %p40 = scmp.eq.s32.totalorder %s23, 1
      %p41 = por %p39, %p40
      %p42 = scmp.ne.s32.totalorder %s31, %s32
      %p43 = scmp.eq.s32.totalorder %s23, 0
      %p44 = por %p42, %p43
      %p45 = scmp.ne.s32.totalorder %s31, %s32
      %p46 = scmp.eq.s32.totalorder %s24, 1
      %p47 = por %p45, %p46
      %p49 = scmp.ne.s32.totalorder %s32, %s48
      %p50 = scmp.eq.s32.totalorder %s24, 0
      %p51 = por %p49, %p50
      %s53 = sadd.s32 %s52, 1
      %p56 = scmp.eq.s32.totalorder %s18, 1
      %p57 = scmp.ne.s32.totalorder %s52, %s54
      %p58 = scmp.eq.s32.totalorder %s18, 0
      %p59 = por %p57, %p58
      %p60 = scmp.ne.s32.totalorder %s52, %s54
      %p61 = scmp.eq.s32.totalorder %s23, 1
      %p62 = por %p60, %p61
      %p63 = scmp.ne.s32.totalorder %s54, %s55
      %p64 = scmp.eq.s32.totalorder %s23, 0
      %p65 = por %p63, %p64
      %p66 = scmp.ne.s32.totalorder %s54, %s55
      %p67 = scmp.eq.s32.totalorder %s24, 1
      %p68 = por %p66, %p67
      %p70 = scmp.ne.s32.totalorder %s55, %s69
      %p71 = scmp.eq.s32.totalorder %s24, 0
      %p72 = por %p70, %p71
      %s74 = sadd.s32 %s73, 1
      %p77 = scmp.eq.s32.totalorder %s18, 1
      %p78 = scmp.ne.s32.totalorder %s73, %s75
      %p79 = scmp.eq.s32.totalorder %s18, 0
      %p80 = por %p78, %p79
      %p81 = scmp.ne.s32.totalorder %s73, %s75
      %p82 = scmp.eq.s32.totalorder %s23, 1
      %p83 = por %p81, %p82
      %p84 = scmp.ne.s32.totalorder %s75, %s76
      %p85 = scmp.eq.s32.totalorder %s23, 0
      %p86 = por %p84, %p85
      %p87 = scmp.ne.s32.totalorder %s75, %s76
      %p88 = scmp.eq.s32.totalorder %s24, 1
      %p89 = por %p87, %p88
      %p91 = scmp.ne.s32.totalorder %s76, %s90
      %p92 = scmp.eq.s32.totalorder %s24, 0
      %p93 = por %p91, %p92
      %s95 = sadd.s32 %s94, 1
      %p98 = scmp.eq.s32.totalorder %s18, 1
      %p99 = scmp.ne.s32.totalorder %s94, %s96
      %p100 = scmp.eq.s32.totalorder %s18, 0
      %p101 = por %p99, %p100
      %p102 = scmp.ne.s32.totalorder %s94, %s96
      %p103 = scmp.eq.s32.totalorder %s23, 1
      %p104 = por %p102, %p103
      %p105 = scmp.ne.s32.totalorder %s96, %s97
      %p106 = scmp.eq.s32.totalorder %s23, 0
      %p107 = por %p105, %p106
      %p108 = scmp.ne.s32.totalorder %s96, %s97
      %p109 = scmp.eq.s32.totalorder %s24, 1
      %p110 = por %p108, %p109
      %p112 = scmp.ne.s32.totalorder %s97, %s111
      %p113 = scmp.eq.s32.totalorder %s24, 0
      %p114 = por %p112, %p113
      %s116 = sadd.s32 %s115, 1
      %p119 = scmp.eq.s32.totalorder %s18, 1
      %p120 = scmp.ne.s32.totalorder %s115, %s117
      %p121 = scmp.eq.s32.totalorder %s18, 0
      %p122 = por %p120, %p121
      %p123 = scmp.ne.s32.totalorder %s115, %s117
      %p124 = scmp.eq.s32.totalorder %s23, 1
      %p125 = por %p123, %p124
      %p126 = scmp.ne.s32.totalorder %s117, %s118
      %p127 = scmp.eq.s32.totalorder %s23, 0
      %p128 = por %p126, %p127
      %p129 = scmp.ne.s32.totalorder %s117, %s118
      %p130 = scmp.eq.s32.totalorder %s24, 1
      %p131 = por %p129, %p130
      %p133 = scmp.ne.s32.totalorder %s118, %s132
      %p134 = scmp.eq.s32.totalorder %s24, 0
      %p135 = por %p133, %p134
      %s137 = sadd.s32 %s136, 1
      %p140 = scmp.eq.s32.totalorder %s18, 1
      %p141 = scmp.ne.s32.totalorder %s136, %s138
      %p142 = scmp.eq.s32.totalorder %s18, 0
      %p143 = por %p141, %p142
      %p144 = scmp.ne.s32.totalorder %s136, %s138
      %p145 = scmp.eq.s32.totalorder %s23, 1
      %p146 = por %p144, %p145
      %p147 = scmp.ne.s32.totalorder %s138, %s139
      %p148 = scmp.eq.s32.totalorder %s23, 0
      %p149 = por %p147, %p148
      %p150 = scmp.ne.s32.totalorder %s138, %s139
      %p151 = scmp.eq.s32.totalorder %s24, 1
      %p152 = por %p150, %p151
      %p154 = scmp.ne.s32.totalorder %s139, %s153
      %p155 = scmp.eq.s32.totalorder %s24, 0
      %p156 = por %p154, %p155
      %s158 = sadd.s32 %s157, 1
      %p161 = scmp.eq.s32.totalorder %s18, 1
      %p162 = scmp.ne.s32.totalorder %s157, %s159
      %p163 = scmp.eq.s32.totalorder %s18, 0
      %p164 = por %p162, %p163
      %p165 = scmp.ne.s32.totalorder %s157, %s159
      %p166 = scmp.eq.s32.totalorder %s23, 1
      %p167 = por %p165, %p166
      %p168 = scmp.ne.s32.totalorder %s159, %s160
      %p169 = scmp.eq.s32.totalorder %s23, 0
      %p170 = por %p168, %p169
      %p171 = scmp.ne.s32.totalorder %s159, %s160
      %p172 = scmp.eq.s32.totalorder %s24, 1
      %p173 = por %p171, %p172
      %p175 = scmp.ne.s32.totalorder %s160, %s174
      %p176 = scmp.eq.s32.totalorder %s24, 0
      %p177 = por %p175, %p176
      %s179 = sadd.s32 %s178, 1
      %p182 = scmp.eq.s32.totalorder %s18, 1
      %p183 = scmp.ne.s32.totalorder %s178, %s180
      %p184 = scmp.eq.s32.totalorder %s18, 0
      %p185 = por %p183, %p184
      %p186 = scmp.ne.s32.totalorder %s178, %s180
      %p187 = scmp.eq.s32.totalorder %s23, 1
      %p188 = por %p186, %p187
      %p189 = scmp.ne.s32.totalorder %s180, %s181
      %p190 = scmp.eq.s32.totalorder %s23, 0
      %p191 = por %p189, %p190
      %p192 = scmp.ne.s32.totalorder %s180, %s181
      %p193 = scmp.eq.s32.totalorder %s24, 1
      %p194 = por %p192, %p193
      %p196 = scmp.ne.s32.totalorder %s181, %s195
      %p197 = scmp.eq.s32.totalorder %s24, 0
      %p198 = por %p196, %p197
      %s199 = ssub.s32 %s18, %s25
      %p200 = scmp.eq.s32.totalorder %s199, 0
      %s202 = sadd.s32 %s201, 1
      %s203 = scalar_select %p200, %s201, %s202
      %p206 = pneg %p200
      %p207 = scmp.eq.s32.totalorder %s18, 1
      %p208 = por %p206, %p207
      %p209 = scmp.ne.s32.totalorder %s201, %s204
      %p210 = scmp.eq.s32.totalorder %s18, 0
      %p211 = por %p209, %p210
      %p212 = scmp.ne.s32.totalorder %s201, %s204
      %p213 = scmp.eq.s32.totalorder %s23, 1
      %p214 = por %p212, %p213
      %p215 = scmp.ne.s32.totalorder %s204, %s205
      %p216 = scmp.eq.s32.totalorder %s23, 0
      %p217 = por %p215, %p216
      %p218 = scmp.ne.s32.totalorder %s204, %s205
      %p219 = scmp.eq.s32.totalorder %s24, 1
      %p220 = por %p218, %p219
      %p222 = scmp.ne.s32.totalorder %s205, %s221
      %p223 = scmp.eq.s32.totalorder %s24, 0
      %p224 = por %p222, %p223
      %p225 = scmp.le.s32.totalorder 1, %s18
      %p226 = scmp.lt.s32.totalorder %s18, 3
      %p227 = pnand %p225, %p226
      %p228 = pneg %p227
      // Predicated region
      $region9: #{critic_forward.1} parent=5 // pred_check
        _
      $region10: #{critic_forward.1} parent=5 // pred_check_branch
        %230 = sbr.rel (%p227) target = $region12
      $region11: #{critic_forward.1} parent=5 // pred_region
        %s231 = ssub.s32 %s18, 1
        // Predicated region
        $region13: #{critic_forward.1} parent=11 // pred_check
          %p232 = pneg %p65
        $region14: #{critic_forward.1} parent=11 // pred_check_branch
          %234 = sbr.rel (%p232) target = $region16
        $region15: #{critic_forward.1} parent=11 // pred_region
          %236 = vsyncadd [#allocation4], 0
          %s237 = sshll.u32 %s1, 4
          %s238 = int_to_ptr.hbm [resolvable:$true] %s237
          %s239 = sshll.u32 [#allocation3], 4
          %s240 = int_to_ptr.vmem [resolvable:$true] %s239
          %245 = dma.hbm_to_vmem [thread:$0]  %s238, 4096, %s240, [#allocation4], 256, 256, 16
        $region16: #{critic_forward.1} parent=11 // pred_fallthru
          _
        // Predicated region
        $region17: #{critic_forward.1} parent=11 // pred_check
          %p246 = pneg %p86
        $region18: #{critic_forward.1} parent=11 // pred_check_branch
          %248 = sbr.rel (%p246) target = $region20
        $region19: #{critic_forward.1} parent=11 // pred_region
          _
        $region20: #{critic_forward.1} parent=11 // pred_fallthru
          _
        // Predicated region
        $region21: #{critic_forward.1} parent=11 // pred_check
          %p249 = pneg %p107
        $region22: #{critic_forward.1} parent=11 // pred_check_branch
          %251 = sbr.rel (%p249) target = $region24
        $region23: #{critic_forward.1} parent=11 // pred_region
          %253 = vsyncadd [#allocation6], 0
          %s254 = sshll.u32 %s3, 4
          %s255 = int_to_ptr.hbm [resolvable:$true] %s254
          %s256 = sshll.u32 [#allocation5], 4
          %s257 = int_to_ptr.vmem [resolvable:$true] %s256
          %262 = dma.hbm_to_vmem [thread:$0]  %s255, 12288, %s257, [#allocation6], 192, 192, 12
        $region24: #{critic_forward.1} parent=11 // pred_fallthru
          _
        // Predicated region
        $region25: #{critic_forward.1} parent=11 // pred_check
          %p263 = pneg %p128
        $region26: #{critic_forward.1} parent=11 // pred_check_branch
          %265 = sbr.rel (%p263) target = $region28
        $region27: #{critic_forward.1} parent=11 // pred_region
          %267 = vsyncadd [#allocation6], 0
          %s268 = sshll.u32 %s4, 4
          %s269 = int_to_ptr.hbm [resolvable:$true] %s268
          %s270 = sshll.u32 [#allocation7], 4
          %s271 = int_to_ptr.vmem [resolvable:$true] %s270
          %276 = dma.hbm_to_vmem [thread:$0]  %s269, 3072, %s271, [#allocation6], 192, 192, 12
        $region28: #{critic_forward.1} parent=11 // pred_fallthru
          _
        // Predicated region
        $region29: #{critic_forward.1} parent=11 // pred_check
          %p277 = pneg %p149
        $region30: #{critic_forward.1} parent=11 // pred_check_branch
          %279 = sbr.rel (%p277) target = $region32
        $region31: #{critic_forward.1} parent=11 // pred_region
          _
        $region32: #{critic_forward.1} parent=11 // pred_fallthru
          _
        // Predicated region
        $region33: #{critic_forward.1} parent=11 // pred_check
          %p280 = pneg %p170
        $region34: #{critic_forward.1} parent=11 // pred_check_branch
          %282 = sbr.rel (%p280) target = $region36
        $region35: #{critic_forward.1} parent=11 // pred_region
          _
        $region36: #{critic_forward.1} parent=11 // pred_fallthru
          _
        // Predicated region
        $region37: #{critic_forward.1} parent=11 // pred_check
          %p283 = pneg %p191
        $region38: #{critic_forward.1} parent=11 // pred_check_branch
          %285 = sbr.rel (%p283) target = $region40
        $region39: #{critic_forward.1} parent=11 // pred_region
          _
        $region40: #{critic_forward.1} parent=11 // pred_fallthru
          _
      $region12: #{critic_forward.1} parent=5 // pred_fallthru
        _
      %p286 = scmp.lt.s32.totalorder %s18, 2
      // Predicated region
      $region41: #{critic_forward.1} parent=5 // pred_check
        %p287 = pneg %p286
      $region42: #{critic_forward.1} parent=5 // pred_check_branch
        %289 = sbr.rel (%p287) target = $region44
      $region43: #{critic_forward.1} parent=5 // pred_region
        // Predicated region
        $region45: #{critic_forward.1} parent=43 // pred_check
          %p290 = pneg %p38
        $region46: #{critic_forward.1} parent=43 // pred_check_branch
          %292 = sbr.rel (%p290) target = $region48
        $region47: #{critic_forward.1} parent=43 // pred_region
          %s293 = smul.u32 2, %s18
          %p294 = scmp.lt.s32.totalorder %s293, 3
          %s295 = scalar_select %p294, %s293, 3
          %s296 = smul.addr %s295, 4
          %s297 = scalar_lea.vmem %s0, %s296
          %s298 = smul.u32 2, %s18
        $region48: #{critic_forward.1} parent=43 // pred_fallthru
          _
      $region44: #{critic_forward.1} parent=5 // pred_fallthru
        _
      %p299 = scmp.le.s32.totalorder 1, %s18
      %p300 = scmp.lt.s32.totalorder %s18, 3
      %p301 = pnand %p299, %p300
      %p302 = pneg %p301
      // Predicated region
      $region49: #{critic_forward.1} parent=5 // pred_check
        _
      $region50: #{critic_forward.1} parent=5 // pred_check_branch
        %304 = sbr.rel (%p301) target = $region52
      $region51: #{critic_forward.1} parent=5 // pred_region
        %s305 = ssub.s32 %s18, 1
        // Predicated region
        $region53: #{critic_forward.1} parent=51 // pred_check
          %p306 = pneg %p65
        $region54: #{critic_forward.1} parent=51 // pred_check_branch
          %308 = sbr.rel (%p306) target = $region56
        $region55: #{critic_forward.1} parent=51 // pred_region
          %310 = dma.done [#allocation4], 4096
        $region56: #{critic_forward.1} parent=51 // pred_fallthru
          _
        // Predicated region
        $region57: #{critic_forward.1} parent=51 // pred_check
          %p311 = pneg %p107
        $region58: #{critic_forward.1} parent=51 // pred_check_branch
          %313 = sbr.rel (%p311) target = $region60
        $region59: #{critic_forward.1} parent=51 // pred_region
          %315 = dma.done [#allocation6], 12288
        $region60: #{critic_forward.1} parent=51 // pred_fallthru
          _
        // Predicated region
        $region61: #{critic_forward.1} parent=51 // pred_check
          %p316 = pneg %p128
        $region62: #{critic_forward.1} parent=51 // pred_check_branch
          %318 = sbr.rel (%p316) target = $region64
        $region63: #{critic_forward.1} parent=51 // pred_region
          %320 = dma.done [#allocation6], 3072
        $region64: #{critic_forward.1} parent=51 // pred_fallthru
          _
        %s321 = smul.u32 2, %s23
        %p322 = scmp.lt.s32.totalorder %s321, 3
        %s323 = scalar_select %p322, %s321, 3
        %s324 = smul.addr %s323, 4
        %s325 = scalar_lea.vmem %s0, %s324
        %p326 = pneg %p44
        %p327 = pneg %p41
        %p328 = pneg %p65
        %p329 = pneg %p62
        %p330 = pneg %p86
        %p331 = pneg %p83
        %p332 = pneg %p107
        %p333 = pneg %p104
        %p334 = pneg %p128
        %p335 = pneg %p125
        %p336 = pneg %p149
        %p337 = pneg %p146
        %p338 = pneg %p170
        %p339 = pneg %p167
        %p340 = pneg %p191
        %p341 = pneg %p188
        %p342 = pneg %p217
        %p343 = pneg %p214
        %s344 = smul.u32 2, %s23
        %p345 = scmp.lt.s32.totalorder %s344, 3
        %s346 = scalar_select %p345, %s344, 3
        %s347 = smul.addr %s346, 8
        %s348 = scalar_lea.vmem %s8, %s347
        %s349 = smul.u32 2, %s23
        %p350 = scmp.lt.s32.totalorder %s349, 3
        %s351 = scalar_select %p350, %s349, 3
        %s352 = smul.addr %s351, 4
        %s353 = scalar_lea.vmem %s0, %s352
        %s354 = smul.u32 2, %s23
        %s355 = smul.u32 2, %s23
        %p356 = scmp.lt.s32.totalorder %s355, 3
        %s357 = scalar_select %p356, %s355, 3
        %s358 = smul.addr %s357, 8
        %s359 = scalar_lea.vmem %s8, %s358
        %s360 = smul.u32 2, %s23
        %v361 = vld [vmem:[%s353] sm:$0xf]
        %v362 = vld [vmem:[%s353 + $0x4] sm:$0xf]
        %v363 = vld [vmem:[#allocation3] sm:$0xff]
        %v364 = vld [vmem:[#allocation3 + $0x8] sm:$0xff]
        %v365 = vld [vmem:[#allocation3 + $0x10] sm:$0xff]
        %v366 = vld [vmem:[#allocation3 + $0x18] sm:$0xff]
        %v367 = vld [vmem:[#allocation3 + $0x20] sm:$0xff]
        %v368 = vld [vmem:[#allocation3 + $0x28] sm:$0xff]
        %v369 = vld [vmem:[#allocation3 + $0x30] sm:$0xff]
        %v370 = vld [vmem:[#allocation3 + $0x38] sm:$0xff]
        %v371 = vld [vmem:[#allocation3 + $0x40] sm:$0xff]
        %v372 = vld [vmem:[#allocation3 + $0x48] sm:$0xff]
        %v373 = vld [vmem:[#allocation3 + $0x50] sm:$0xff]
        %v374 = vld [vmem:[#allocation3 + $0x58] sm:$0xff]
        %v375 = vld [vmem:[#allocation3 + $0x60] sm:$0xff]
        %v376 = vld [vmem:[#allocation3 + $0x68] sm:$0xff]
        %v377 = vld [vmem:[#allocation3 + $0x70] sm:$0xff]
        %v378 = vld [vmem:[#allocation3 + $0x78] sm:$0xff]
        %v379 = vld [vmem:[#allocation3 + $0x80] sm:$0xff]
        %v380 = vld [vmem:[#allocation3 + $0x88] sm:$0xff]
        %v381 = vld [vmem:[#allocation3 + $0x90] sm:$0xff]
        %v382 = vld [vmem:[#allocation3 + $0x98] sm:$0xff]
        %v383 = vld [vmem:[#allocation3 + $0xa0] sm:$0xff]
        %v384 = vld [vmem:[#allocation3 + $0xa8] sm:$0xff]
        %v385 = vld [vmem:[#allocation3 + $0xb0] sm:$0xff]
        %v386 = vld [vmem:[#allocation3 + $0xb8] sm:$0xff]
        %v387 = vld [vmem:[#allocation3 + $0xc0] sm:$0xff]
        %v388 = vld [vmem:[#allocation3 + $0xc8] sm:$0xff]
        %v389 = vld [vmem:[#allocation3 + $0xd0] sm:$0xff]
        %v390 = vld [vmem:[#allocation3 + $0xd8] sm:$0xff]
        %v391 = vld [vmem:[#allocation3 + $0xe0] sm:$0xff]
        %v392 = vld [vmem:[#allocation3 + $0xe8] sm:$0xff]
        %v393 = vld [vmem:[#allocation3 + $0xf0] sm:$0xff]
        %v394 = vld [vmem:[#allocation3 + $0xf8] sm:$0xff]
        %v395 = vld [vmem:[%s2] sm:$0xf]
        %v397 = vperm.slane %v395, 0
        %v398 = vperm.slane %v395, 1
        %v399 = vperm.slane %v395, 2
        %v400 = vperm.slane %v395, 3
        %v407 = vunpack.c.l.b16 %v361
        %v408 = vunpack.c.l.b16 %v362
        %v409 = vpack.c.b16 %v408, %v407
        %v443 = vunpack.c.l.b16 %v363
        %v444 = vunpack.c.h.b16 %v363
        %v445 = vunpack.c.l.b16 %v364
        %v446 = vunpack.c.h.b16 %v364
        %v447 = vunpack.c.l.b16 %v365
        %v448 = vunpack.c.h.b16 %v365
        %v449 = vunpack.c.l.b16 %v366
        %v450 = vunpack.c.h.b16 %v366
        %v451 = vunpack.c.l.b16 %v367
        %v452 = vunpack.c.h.b16 %v367
        %v453 = vunpack.c.l.b16 %v368
        %v454 = vunpack.c.h.b16 %v368
        %v455 = vunpack.c.l.b16 %v369
        %v456 = vunpack.c.h.b16 %v369
        %v457 = vunpack.c.l.b16 %v370
        %v458 = vunpack.c.h.b16 %v370
        %v459 = vunpack.c.l.b16 %v371
        %v460 = vunpack.c.h.b16 %v371
        %v461 = vunpack.c.l.b16 %v372
        %v462 = vunpack.c.h.b16 %v372
        %v463 = vunpack.c.l.b16 %v373
        %v464 = vunpack.c.h.b16 %v373
        %v465 = vunpack.c.l.b16 %v374
        %v466 = vunpack.c.h.b16 %v374
        %v467 = vunpack.c.l.b16 %v375
        %v468 = vunpack.c.h.b16 %v375
        %v469 = vunpack.c.l.b16 %v376
        %v470 = vunpack.c.h.b16 %v376
        %v471 = vunpack.c.l.b16 %v377
        %v472 = vunpack.c.h.b16 %v377
        %v473 = vunpack.c.l.b16 %v378
        %v474 = vunpack.c.h.b16 %v378
        %v475 = vunpack.c.l.b16 %v379
        %v476 = vunpack.c.h.b16 %v379
        %v477 = vunpack.c.l.b16 %v380
        %v478 = vunpack.c.h.b16 %v380
        %v479 = vunpack.c.l.b16 %v381
        %v480 = vunpack.c.h.b16 %v381
        %v481 = vunpack.c.l.b16 %v382
        %v482 = vunpack.c.h.b16 %v382
        %v483 = vunpack.c.l.b16 %v383
        %v484 = vunpack.c.h.b16 %v383
        %v485 = vunpack.c.l.b16 %v384
        %v486 = vunpack.c.h.b16 %v384
        %v487 = vunpack.c.l.b16 %v385
        %v488 = vunpack.c.h.b16 %v385
        %v489 = vunpack.c.l.b16 %v386
        %v490 = vunpack.c.h.b16 %v386
        %v491 = vunpack.c.l.b16 %v387
        %v492 = vunpack.c.h.b16 %v387
        %v493 = vunpack.c.l.b16 %v388
        %v494 = vunpack.c.h.b16 %v388
        %v495 = vunpack.c.l.b16 %v389
        %v496 = vunpack.c.h.b16 %v389
        %v497 = vunpack.c.l.b16 %v390
        %v498 = vunpack.c.h.b16 %v390
        %v499 = vunpack.c.l.b16 %v391
        %v500 = vunpack.c.h.b16 %v391
        %v501 = vunpack.c.l.b16 %v392
        %v502 = vunpack.c.h.b16 %v392
        %v503 = vunpack.c.l.b16 %v393
        %v504 = vunpack.c.h.b16 %v393
        %v505 = vunpack.c.l.b16 %v394
        %v506 = vunpack.c.h.b16 %v394
        %v507 = vpack.c.b16 %v447, %v443
        %v508 = vpack.c.b16 %v448, %v444
        %v509 = vpack.c.b16 %v449, %v445
        %v510 = vpack.c.b16 %v450, %v446
        %v511 = vpack.c.b16 %v455, %v451
        %v512 = vpack.c.b16 %v456, %v452
        %v513 = vpack.c.b16 %v457, %v453
        %v514 = vpack.c.b16 %v458, %v454
        %v515 = vpack.c.b16 %v463, %v459
        %v516 = vpack.c.b16 %v464, %v460
        %v517 = vpack.c.b16 %v465, %v461
        %v518 = vpack.c.b16 %v466, %v462
        %v519 = vpack.c.b16 %v471, %v467
        %v520 = vpack.c.b16 %v472, %v468
        %v521 = vpack.c.b16 %v473, %v469
        %v522 = vpack.c.b16 %v474, %v470
        %v523 = vpack.c.b16 %v479, %v475
        %v524 = vpack.c.b16 %v480, %v476
        %v525 = vpack.c.b16 %v481, %v477
        %v526 = vpack.c.b16 %v482, %v478
        %v527 = vpack.c.b16 %v487, %v483
        %v528 = vpack.c.b16 %v488, %v484
        %v529 = vpack.c.b16 %v489, %v485
        %v530 = vpack.c.b16 %v490, %v486
        %v531 = vpack.c.b16 %v495, %v491
        %v532 = vpack.c.b16 %v496, %v492
        %v533 = vpack.c.b16 %v497, %v493
        %v534 = vpack.c.b16 %v498, %v494
        %v535 = vpack.c.b16 %v503, %v499
        %v536 = vpack.c.b16 %v504, %v500
        %v537 = vpack.c.b16 %v505, %v501
        %v538 = vpack.c.b16 %v506, %v502
        %571 = vmatpush.bf16.msra.mxu0 %v535
        %572 = vmatpush.bf16.msra.mxu0 %v531
        %573 = vmatpush.bf16.msra.mxu0 %v527
        %574 = vmatpush.bf16.msra.mxu0 %v523
        %575 = vmatpush.bf16.msra.mxu0 %v519
        %576 = vmatpush.bf16.msra.mxu0 %v515
        %577 = vmatpush.bf16.msra.mxu0 %v511
        %578 = vmatpush.bf16.msra.mxu0 %v507
        %579 = vmatmul.bf16.gmra.mxu0 %v409
        %v580 = vpop.f32.mrf.mxu0
        %v581 = vadd.f32 %v397, %v580
        %v582 = vpop.f32.mrf.mxu0
        %v583 = vadd.f32 %v397, %v582
        %584 = vdwg.mxu0
        %585 = vmatpush.bf16.msra.mxu0 %v536
        %586 = vmatpush.bf16.msra.mxu0 %v532
        %587 = vmatpush.bf16.msra.mxu0 %v528
        %588 = vmatpush.bf16.msra.mxu0 %v524
        %589 = vmatpush.bf16.msra.mxu0 %v520
        %590 = vmatpush.bf16.msra.mxu0 %v516
        %591 = vmatpush.bf16.msra.mxu0 %v512
        %592 = vmatpush.bf16.msra.mxu0 %v508
        %593 = vmatmul.bf16.gmra.mxu0 %v409
        %v594 = vpop.f32.mrf.mxu0
        %v595 = vadd.f32 %v398, %v594
        %v596 = vpop.f32.mrf.mxu0
        %v597 = vadd.f32 %v398, %v596
        %598 = vdwg.mxu0
        %599 = vmatpush.bf16.msra.mxu0 %v537
        %600 = vmatpush.bf16.msra.mxu0 %v533
        %601 = vmatpush.bf16.msra.mxu0 %v529
        %602 = vmatpush.bf16.msra.mxu0 %v525
        %603 = vmatpush.bf16.msra.mxu0 %v521
        %604 = vmatpush.bf16.msra.mxu0 %v517
        %605 = vmatpush.bf16.msra.mxu0 %v513
        %606 = vmatpush.bf16.msra.mxu0 %v509
        %607 = vmatmul.bf16.gmra.mxu0 %v409
        %v608 = vpop.f32.mrf.mxu0
        %v609 = vadd.f32 %v399, %v608
        %v610 = vpop.f32.mrf.mxu0
        %v611 = vadd.f32 %v399, %v610
        %612 = vdwg.mxu0
        %613 = vmatpush.bf16.msra.mxu0 %v538
        %614 = vmatpush.bf16.msra.mxu0 %v534
        %615 = vmatpush.bf16.msra.mxu0 %v530
        %616 = vmatpush.bf16.msra.mxu0 %v526
        %617 = vmatpush.bf16.msra.mxu0 %v522
        %618 = vmatpush.bf16.msra.mxu0 %v518
        %619 = vmatpush.bf16.msra.mxu0 %v514
        %620 = vmatpush.bf16.msra.mxu0 %v510
        %621 = vmatmul.bf16.gmra.mxu0 %v409
        %v622 = vpop.f32.mrf.mxu0
        %v623 = vadd.f32 %v400, %v622
        %v624 = vpop.f32.mrf.mxu0
        %v625 = vadd.f32 %v400, %v624
        %626 = vdwg.mxu0
        %v627 = vmax.f32 %v581, 0.0
        %v628 = vmax.f32 %v595, 0.0
        %v629 = vmax.f32 %v609, 0.0
        %v630 = vmax.f32 %v623, 0.0
        %v631 = vmax.f32 %v583, 0.0
        %v632 = vmax.f32 %v597, 0.0
        %v633 = vmax.f32 %v611, 0.0
        %v634 = vmax.f32 %v625, 0.0
        %v635 = vpack.c.bf16 %v631, %v627
        %v636 = vpack.c.bf16 %v632, %v628
        %v637 = vpack.c.bf16 %v633, %v629
        %v638 = vpack.c.bf16 %v634, %v630
        %v639 = vld [vmem:[#allocation5] sm:$0xff]
        %v640 = vld [vmem:[#allocation5 + $0x8] sm:$0xf]
        %v641 = vld [vmem:[#allocation5 + $0xc] sm:$0xff]
        %v642 = vld [vmem:[#allocation5 + $0x14] sm:$0xf]
        %v643 = vld [vmem:[#allocation5 + $0x18] sm:$0xff]
        %v644 = vld [vmem:[#allocation5 + $0x20] sm:$0xf]
        %v645 = vld [vmem:[#allocation5 + $0x24] sm:$0xff]
        %v646 = vld [vmem:[#allocation5 + $0x2c] sm:$0xf]
        %v647 = vld [vmem:[#allocation5 + $0x30] sm:$0xff]
        %v648 = vld [vmem:[#allocation5 + $0x38] sm:$0xf]
        %v649 = vld [vmem:[#allocation5 + $0x3c] sm:$0xff]
        %v650 = vld [vmem:[#allocation5 + $0x44] sm:$0xf]
        %v651 = vld [vmem:[#allocation5 + $0x48] sm:$0xff]
        %v652 = vld [vmem:[#allocation5 + $0x50] sm:$0xf]
        %v653 = vld [vmem:[#allocation5 + $0x54] sm:$0xff]
        %v654 = vld [vmem:[#allocation5 + $0x5c] sm:$0xf]
        %v655 = vld [vmem:[#allocation5 + $0x60] sm:$0xff]
        %v656 = vld [vmem:[#allocation5 + $0x68] sm:$0xf]
        %v657 = vld [vmem:[#allocation5 + $0x6c] sm:$0xff]
        %v658 = vld [vmem:[#allocation5 + $0x74] sm:$0xf]
        %v659 = vld [vmem:[#allocation5 + $0x78] sm:$0xff]
        %v660 = vld [vmem:[#allocation5 + $0x80] sm:$0xf]
        %v661 = vld [vmem:[#allocation5 + $0x84] sm:$0xff]
        %v662 = vld [vmem:[#allocation5 + $0x8c] sm:$0xf]
        %v663 = vld [vmem:[#allocation5 + $0x90] sm:$0xff]
        %v664 = vld [vmem:[#allocation5 + $0x98] sm:$0xf]
        %v665 = vld [vmem:[#allocation5 + $0x9c] sm:$0xff]
        %v666 = vld [vmem:[#allocation5 + $0xa4] sm:$0xf]
        %v667 = vld [vmem:[#allocation5 + $0xa8] sm:$0xff]
        %v668 = vld [vmem:[#allocation5 + $0xb0] sm:$0xf]
        %v669 = vld [vmem:[#allocation5 + $0xb4] sm:$0xff]
        %v670 = vld [vmem:[#allocation5 + $0xbc] sm:$0xf]
        %v671 = vld [vmem:[#allocation5 + $0xc0] sm:$0xff]
        %v672 = vld [vmem:[#allocation5 + $0xc8] sm:$0xf]
        %v673 = vld [vmem:[#allocation5 + $0xcc] sm:$0xff]
        %v674 = vld [vmem:[#allocation5 + $0xd4] sm:$0xf]
        %v675 = vld [vmem:[#allocation5 + $0xd8] sm:$0xff]
        %v676 = vld [vmem:[#allocation5 + $0xe0] sm:$0xf]
        %v677 = vld [vmem:[#allocation5 + $0xe4] sm:$0xff]
        %v678 = vld [vmem:[#allocation5 + $0xec] sm:$0xf]
        %v679 = vld [vmem:[#allocation5 + $0xf0] sm:$0xff]
        %v680 = vld [vmem:[#allocation5 + $0xf8] sm:$0xf]
        %v681 = vld [vmem:[#allocation5 + $0xfc] sm:$0xff]
        %v682 = vld [vmem:[#allocation5 + $0x104] sm:$0xf]
        %v683 = vld [vmem:[#allocation5 + $0x108] sm:$0xff]
        %v684 = vld [vmem:[#allocation5 + $0x110] sm:$0xf]
        %v685 = vld [vmem:[#allocation5 + $0x114] sm:$0xff]
        %v686 = vld [vmem:[#allocation5 + $0x11c] sm:$0xf]
        %v687 = vld [vmem:[#allocation5 + $0x120] sm:$0xff]
        %v688 = vld [vmem:[#allocation5 + $0x128] sm:$0xf]
        %v689 = vld [vmem:[#allocation5 + $0x12c] sm:$0xff]
        %v690 = vld [vmem:[#allocation5 + $0x134] sm:$0xf]
        %v691 = vld [vmem:[#allocation5 + $0x138] sm:$0xff]
        %v692 = vld [vmem:[#allocation5 + $0x140] sm:$0xf]
        %v693 = vld [vmem:[#allocation5 + $0x144] sm:$0xff]
        %v694 = vld [vmem:[#allocation5 + $0x14c] sm:$0xf]
        %v695 = vld [vmem:[#allocation5 + $0x150] sm:$0xff]
        %v696 = vld [vmem:[#allocation5 + $0x158] sm:$0xf]
        %v697 = vld [vmem:[#allocation5 + $0x15c] sm:$0xff]
        %v698 = vld [vmem:[#allocation5 + $0x164] sm:$0xf]
        %v699 = vld [vmem:[#allocation5 + $0x168] sm:$0xff]
        %v700 = vld [vmem:[#allocation5 + $0x170] sm:$0xf]
        %v701 = vld [vmem:[#allocation5 + $0x174] sm:$0xff]
        %v702 = vld [vmem:[#allocation5 + $0x17c] sm:$0xf]
        %v703 = vld [vmem:[#allocation5 + $0x180] sm:$0xff]
        %v704 = vld [vmem:[#allocation5 + $0x188] sm:$0xf]
        %v705 = vld [vmem:[#allocation5 + $0x18c] sm:$0xff]
        %v706 = vld [vmem:[#allocation5 + $0x194] sm:$0xf]
        %v707 = vld [vmem:[#allocation5 + $0x198] sm:$0xff]
        %v708 = vld [vmem:[#allocation5 + $0x1a0] sm:$0xf]
        %v709 = vld [vmem:[#allocation5 + $0x1a4] sm:$0xff]
        %v710 = vld [vmem:[#allocation5 + $0x1ac] sm:$0xf]
        %v711 = vld [vmem:[#allocation5 + $0x1b0] sm:$0xff]
        %v712 = vld [vmem:[#allocation5 + $0x1b8] sm:$0xf]
        %v713 = vld [vmem:[#allocation5 + $0x1bc] sm:$0xff]
        %v714 = vld [vmem:[#allocation5 + $0x1c4] sm:$0xf]
        %v715 = vld [vmem:[#allocation5 + $0x1c8] sm:$0xff]
        %v716 = vld [vmem:[#allocation5 + $0x1d0] sm:$0xf]
        %v717 = vld [vmem:[#allocation5 + $0x1d4] sm:$0xff]
        %v718 = vld [vmem:[#allocation5 + $0x1dc] sm:$0xf]
        %v719 = vld [vmem:[#allocation5 + $0x1e0] sm:$0xff]
        %v720 = vld [vmem:[#allocation5 + $0x1e8] sm:$0xf]
        %v721 = vld [vmem:[#allocation5 + $0x1ec] sm:$0xff]
        %v722 = vld [vmem:[#allocation5 + $0x1f4] sm:$0xf]
        %v723 = vld [vmem:[#allocation5 + $0x1f8] sm:$0xff]
        %v724 = vld [vmem:[#allocation5 + $0x200] sm:$0xf]
        %v725 = vld [vmem:[#allocation5 + $0x204] sm:$0xff]
        %v726 = vld [vmem:[#allocation5 + $0x20c] sm:$0xf]
        %v727 = vld [vmem:[#allocation5 + $0x210] sm:$0xff]
        %v728 = vld [vmem:[#allocation5 + $0x218] sm:$0xf]
        %v729 = vld [vmem:[#allocation5 + $0x21c] sm:$0xff]
        %v730 = vld [vmem:[#allocation5 + $0x224] sm:$0xf]
        %v731 = vld [vmem:[#allocation5 + $0x228] sm:$0xff]
        %v732 = vld [vmem:[#allocation5 + $0x230] sm:$0xf]
        %v733 = vld [vmem:[#allocation5 + $0x234] sm:$0xff]
        %v734 = vld [vmem:[#allocation5 + $0x23c] sm:$0xf]
        %v735 = vld [vmem:[#allocation5 + $0x240] sm:$0xff]
        %v736 = vld [vmem:[#allocation5 + $0x248] sm:$0xf]
        %v737 = vld [vmem:[#allocation5 + $0x24c] sm:$0xff]
        %v738 = vld [vmem:[#allocation5 + $0x254] sm:$0xf]
        %v739 = vld [vmem:[#allocation5 + $0x258] sm:$0xff]
        %v740 = vld [vmem:[#allocation5 + $0x260] sm:$0xf]
        %v741 = vld [vmem:[#allocation5 + $0x264] sm:$0xff]
        %v742 = vld [vmem:[#allocation5 + $0x26c] sm:$0xf]
        %v743 = vld [vmem:[#allocation5 + $0x270] sm:$0xff]
        %v744 = vld [vmem:[#allocation5 + $0x278] sm:$0xf]
        %v745 = vld [vmem:[#allocation5 + $0x27c] sm:$0xff]
        %v746 = vld [vmem:[#allocation5 + $0x284] sm:$0xf]
        %v747 = vld [vmem:[#allocation5 + $0x288] sm:$0xff]
        %v748 = vld [vmem:[#allocation5 + $0x290] sm:$0xf]
        %v749 = vld [vmem:[#allocation5 + $0x294] sm:$0xff]
        %v750 = vld [vmem:[#allocation5 + $0x29c] sm:$0xf]
        %v751 = vld [vmem:[#allocation5 + $0x2a0] sm:$0xff]
        %v752 = vld [vmem:[#allocation5 + $0x2a8] sm:$0xf]
        %v753 = vld [vmem:[#allocation5 + $0x2ac] sm:$0xff]
        %v754 = vld [vmem:[#allocation5 + $0x2b4] sm:$0xf]
        %v755 = vld [vmem:[#allocation5 + $0x2b8] sm:$0xff]
        %v756 = vld [vmem:[#allocation5 + $0x2c0] sm:$0xf]
        %v757 = vld [vmem:[#allocation5 + $0x2c4] sm:$0xff]
        %v758 = vld [vmem:[#allocation5 + $0x2cc] sm:$0xf]
        %v759 = vld [vmem:[#allocation5 + $0x2d0] sm:$0xff]
        %v760 = vld [vmem:[#allocation5 + $0x2d8] sm:$0xf]
        %v761 = vld [vmem:[#allocation5 + $0x2dc] sm:$0xff]
        %v762 = vld [vmem:[#allocation5 + $0x2e4] sm:$0xf]
        %v763 = vld [vmem:[#allocation5 + $0x2e8] sm:$0xff]
        %v764 = vld [vmem:[#allocation5 + $0x2f0] sm:$0xf]
        %v765 = vld [vmem:[#allocation5 + $0x2f4] sm:$0xff]
        %v766 = vld [vmem:[#allocation5 + $0x2fc] sm:$0xf]
        %v767 = vld [vmem:[#allocation7] sm:$0xff]
        %v768 = vld [vmem:[#allocation7 + $0x8] sm:$0xf]
        %v769 = vld [vmem:[#allocation7 + $0xc] sm:$0xff]
        %v770 = vld [vmem:[#allocation7 + $0x14] sm:$0xf]
        %v771 = vld [vmem:[#allocation7 + $0x18] sm:$0xff]
        %v772 = vld [vmem:[#allocation7 + $0x20] sm:$0xf]
        %v773 = vld [vmem:[#allocation7 + $0x24] sm:$0xff]
        %v774 = vld [vmem:[#allocation7 + $0x2c] sm:$0xf]
        %v775 = vld [vmem:[#allocation7 + $0x30] sm:$0xff]
        %v776 = vld [vmem:[#allocation7 + $0x38] sm:$0xf]
        %v777 = vld [vmem:[#allocation7 + $0x3c] sm:$0xff]
        %v778 = vld [vmem:[#allocation7 + $0x44] sm:$0xf]
        %v779 = vld [vmem:[#allocation7 + $0x48] sm:$0xff]
        %v780 = vld [vmem:[#allocation7 + $0x50] sm:$0xf]
        %v781 = vld [vmem:[#allocation7 + $0x54] sm:$0xff]
        %v782 = vld [vmem:[#allocation7 + $0x5c] sm:$0xf]
        %v783 = vld [vmem:[#allocation7 + $0x60] sm:$0xff]
        %v784 = vld [vmem:[#allocation7 + $0x68] sm:$0xf]
        %v785 = vld [vmem:[#allocation7 + $0x6c] sm:$0xff]
        %v786 = vld [vmem:[#allocation7 + $0x74] sm:$0xf]
        %v787 = vld [vmem:[#allocation7 + $0x78] sm:$0xff]
        %v788 = vld [vmem:[#allocation7 + $0x80] sm:$0xf]
        %v789 = vld [vmem:[#allocation7 + $0x84] sm:$0xff]
        %v790 = vld [vmem:[#allocation7 + $0x8c] sm:$0xf]
        %v791 = vld [vmem:[#allocation7 + $0x90] sm:$0xff]
        %v792 = vld [vmem:[#allocation7 + $0x98] sm:$0xf]
        %v793 = vld [vmem:[#allocation7 + $0x9c] sm:$0xff]
        %v794 = vld [vmem:[#allocation7 + $0xa4] sm:$0xf]
        %v795 = vld [vmem:[#allocation7 + $0xa8] sm:$0xff]
        %v796 = vld [vmem:[#allocation7 + $0xb0] sm:$0xf]
        %v797 = vld [vmem:[#allocation7 + $0xb4] sm:$0xff]
        %v798 = vld [vmem:[#allocation7 + $0xbc] sm:$0xf]
        %v831 = vunpack.c.l.b16 %v767
        %v832 = vunpack.c.h.b16 %v767
        %v833 = vunpack.c.l.b16 %v768
        %v834 = vunpack.c.l.b16 %v769
        %v835 = vunpack.c.h.b16 %v769
        %v836 = vunpack.c.l.b16 %v770
        %v837 = vunpack.c.l.b16 %v771
        %v838 = vunpack.c.h.b16 %v771
        %v839 = vunpack.c.l.b16 %v772
        %v840 = vunpack.c.l.b16 %v773
        %v841 = vunpack.c.h.b16 %v773
        %v842 = vunpack.c.l.b16 %v774
        %v843 = vunpack.c.l.b16 %v775
        %v844 = vunpack.c.h.b16 %v775
        %v845 = vunpack.c.l.b16 %v776
        %v846 = vunpack.c.l.b16 %v777
        %v847 = vunpack.c.h.b16 %v777
        %v848 = vunpack.c.l.b16 %v778
        %v849 = vunpack.c.l.b16 %v779
        %v850 = vunpack.c.h.b16 %v779
        %v851 = vunpack.c.l.b16 %v780
        %v852 = vunpack.c.l.b16 %v781
        %v853 = vunpack.c.h.b16 %v781
        %v854 = vunpack.c.l.b16 %v782
        %v855 = vunpack.c.l.b16 %v783
        %v856 = vunpack.c.h.b16 %v783
        %v857 = vunpack.c.l.b16 %v784
        %v858 = vunpack.c.l.b16 %v785
        %v859 = vunpack.c.h.b16 %v785
        %v860 = vunpack.c.l.b16 %v786
        %v861 = vunpack.c.l.b16 %v787
        %v862 = vunpack.c.h.b16 %v787
        %v863 = vunpack.c.l.b16 %v788
        %v864 = vunpack.c.l.b16 %v789
        %v865 = vunpack.c.h.b16 %v789
        %v866 = vunpack.c.l.b16 %v790
        %v867 = vunpack.c.l.b16 %v791
        %v868 = vunpack.c.h.b16 %v791
        %v869 = vunpack.c.l.b16 %v792
        %v870 = vunpack.c.l.b16 %v793
        %v871 = vunpack.c.h.b16 %v793
        %v872 = vunpack.c.l.b16 %v794
        %v873 = vunpack.c.l.b16 %v795
        %v874 = vunpack.c.h.b16 %v795
        %v875 = vunpack.c.l.b16 %v796
        %v876 = vunpack.c.l.b16 %v797
        %v877 = vunpack.c.h.b16 %v797
        %v878 = vunpack.c.l.b16 %v798
        %v879 = vpack.c.b16 %v834, %v831
        %v880 = vpack.c.b16 %v835, %v832
        %v881 = vpack.c.b16 %v836, %v833
        %v882 = vpack.c.b16 %v840, %v837
        %v883 = vpack.c.b16 %v841, %v838
        %v884 = vpack.c.b16 %v842, %v839
        %v885 = vpack.c.b16 %v846, %v843
        %v886 = vpack.c.b16 %v847, %v844
        %v887 = vpack.c.b16 %v848, %v845
        %v888 = vpack.c.b16 %v852, %v849
        %v889 = vpack.c.b16 %v853, %v850
        %v890 = vpack.c.b16 %v854, %v851
        %v891 = vpack.c.b16 %v858, %v855
        %v892 = vpack.c.b16 %v859, %v856
        %v893 = vpack.c.b16 %v860, %v857
        %v894 = vpack.c.b16 %v864, %v861
        %v895 = vpack.c.b16 %v865, %v862
        %v896 = vpack.c.b16 %v866, %v863
        %v897 = vpack.c.b16 %v870, %v867
        %v898 = vpack.c.b16 %v871, %v868
        %v899 = vpack.c.b16 %v872, %v869
        %v900 = vpack.c.b16 %v876, %v873
        %v901 = vpack.c.b16 %v877, %v874
        %v902 = vpack.c.b16 %v878, %v875
        %927 = vmatpush.bf16.msra.mxu0 %v900
        %928 = vmatpush.bf16.msra.mxu0 %v897
        %929 = vmatpush.bf16.msra.mxu0 %v894
        %930 = vmatpush.bf16.msra.mxu0 %v891
        %931 = vmatpush.bf16.msra.mxu0 %v888
        %932 = vmatpush.bf16.msra.mxu0 %v885
        %933 = vmatpush.bf16.msra.mxu0 %v882
        %934 = vmatpush.bf16.msra.mxu0 %v879
        %935 = vmatmul.bf16.gmra.mxu0 %v409
        %v936 = vpop.f32.mrf.mxu0
        %v937 = vadd.f32 0.0, %v936
        %v938 = vpop.f32.mrf.mxu0
        %v939 = vadd.f32 0.0, %v938
        %940 = vdwg.mxu0
        %941 = vmatpush.bf16.msra.mxu0 %v901
        %942 = vmatpush.bf16.msra.mxu0 %v898
        %943 = vmatpush.bf16.msra.mxu0 %v895
        %944 = vmatpush.bf16.msra.mxu0 %v892
        %945 = vmatpush.bf16.msra.mxu0 %v889
        %946 = vmatpush.bf16.msra.mxu0 %v886
        %947 = vmatpush.bf16.msra.mxu0 %v883
        %948 = vmatpush.bf16.msra.mxu0 %v880
        %949 = vmatmul.bf16.gmra.mxu0 %v409
        %v950 = vpop.f32.mrf.mxu0
        %v951 = vadd.f32 0.0, %v950
        %v952 = vpop.f32.mrf.mxu0
        %v953 = vadd.f32 0.0, %v952
        %954 = vdwg.mxu0
        %955 = vmatpush.bf16.msra.mxu0 %v902
        %956 = vmatpush.bf16.msra.mxu0 %v899
        %957 = vmatpush.bf16.msra.mxu0 %v896
        %958 = vmatpush.bf16.msra.mxu0 %v893
        %959 = vmatpush.bf16.msra.mxu0 %v890
        %960 = vmatpush.bf16.msra.mxu0 %v887
        %961 = vmatpush.bf16.msra.mxu0 %v884
        %962 = vmatpush.bf16.msra.mxu0 %v881
        %963 = vmatmul.bf16.gmra.mxu0 %v409
        %v964 = vpop.f32.mrf.mxu0
        %v965 = vadd.f32 0.0, %v964
        %v966 = vpop.f32.mrf.mxu0
        %v967 = vadd.f32 0.0, %v966
        %968 = vdwg.mxu0
        %v1097 = vunpack.c.l.b16 %v639
        %v1098 = vunpack.c.h.b16 %v639
        %v1099 = vunpack.c.l.b16 %v640
        %v1100 = vunpack.c.l.b16 %v641
        %v1101 = vunpack.c.h.b16 %v641
        %v1102 = vunpack.c.l.b16 %v642
        %v1103 = vunpack.c.l.b16 %v643
        %v1104 = vunpack.c.h.b16 %v643
        %v1105 = vunpack.c.l.b16 %v644
        %v1106 = vunpack.c.l.b16 %v645
        %v1107 = vunpack.c.h.b16 %v645
        %v1108 = vunpack.c.l.b16 %v646
        %v1109 = vunpack.c.l.b16 %v647
        %v1110 = vunpack.c.h.b16 %v647
        %v1111 = vunpack.c.l.b16 %v648
        %v1112 = vunpack.c.l.b16 %v649
        %v1113 = vunpack.c.h.b16 %v649
        %v1114 = vunpack.c.l.b16 %v650
        %v1115 = vunpack.c.l.b16 %v651
        %v1116 = vunpack.c.h.b16 %v651
        %v1117 = vunpack.c.l.b16 %v652
        %v1118 = vunpack.c.l.b16 %v653
        %v1119 = vunpack.c.h.b16 %v653
        %v1120 = vunpack.c.l.b16 %v654
        %v1121 = vunpack.c.l.b16 %v655
        %v1122 = vunpack.c.h.b16 %v655
        %v1123 = vunpack.c.l.b16 %v656
        %v1124 = vunpack.c.l.b16 %v657
        %v1125 = vunpack.c.h.b16 %v657
        %v1126 = vunpack.c.l.b16 %v658
        %v1127 = vunpack.c.l.b16 %v659
        %v1128 = vunpack.c.h.b16 %v659
        %v1129 = vunpack.c.l.b16 %v660
        %v1130 = vunpack.c.l.b16 %v661
        %v1131 = vunpack.c.h.b16 %v661
        %v1132 = vunpack.c.l.b16 %v662
        %v1133 = vunpack.c.l.b16 %v663
        %v1134 = vunpack.c.h.b16 %v663
        %v1135 = vunpack.c.l.b16 %v664
        %v1136 = vunpack.c.l.b16 %v665
        %v1137 = vunpack.c.h.b16 %v665
        %v1138 = vunpack.c.l.b16 %v666
        %v1139 = vunpack.c.l.b16 %v667
        %v1140 = vunpack.c.h.b16 %v667
        %v1141 = vunpack.c.l.b16 %v668
        %v1142 = vunpack.c.l.b16 %v669
        %v1143 = vunpack.c.h.b16 %v669
        %v1144 = vunpack.c.l.b16 %v670
        %v1145 = vunpack.c.l.b16 %v671
        %v1146 = vunpack.c.h.b16 %v671
        %v1147 = vunpack.c.l.b16 %v672
        %v1148 = vunpack.c.l.b16 %v673
        %v1149 = vunpack.c.h.b16 %v673
        %v1150 = vunpack.c.l.b16 %v674
        %v1151 = vunpack.c.l.b16 %v675
        %v1152 = vunpack.c.h.b16 %v675
        %v1153 = vunpack.c.l.b16 %v676
        %v1154 = vunpack.c.l.b16 %v677
        %v1155 = vunpack.c.h.b16 %v677
        %v1156 = vunpack.c.l.b16 %v678
        %v1157 = vunpack.c.l.b16 %v679
        %v1158 = vunpack.c.h.b16 %v679
        %v1159 = vunpack.c.l.b16 %v680
        %v1160 = vunpack.c.l.b16 %v681
        %v1161 = vunpack.c.h.b16 %v681
        %v1162 = vunpack.c.l.b16 %v682
        %v1163 = vunpack.c.l.b16 %v683
        %v1164 = vunpack.c.h.b16 %v683
        %v1165 = vunpack.c.l.b16 %v684
        %v1166 = vunpack.c.l.b16 %v685
        %v1167 = vunpack.c.h.b16 %v685
        %v1168 = vunpack.c.l.b16 %v686
        %v1169 = vunpack.c.l.b16 %v687
        %v1170 = vunpack.c.h.b16 %v687
        %v1171 = vunpack.c.l.b16 %v688
        %v1172 = vunpack.c.l.b16 %v689
        %v1173 = vunpack.c.h.b16 %v689
        %v1174 = vunpack.c.l.b16 %v690
        %v1175 = vunpack.c.l.b16 %v691
        %v1176 = vunpack.c.h.b16 %v691
        %v1177 = vunpack.c.l.b16 %v692
        %v1178 = vunpack.c.l.b16 %v693
        %v1179 = vunpack.c.h.b16 %v693
        %v1180 = vunpack.c.l.b16 %v694
        %v1181 = vunpack.c.l.b16 %v695
        %v1182 = vunpack.c.h.b16 %v695
        %v1183 = vunpack.c.l.b16 %v696
        %v1184 = vunpack.c.l.b16 %v697
        %v1185 = vunpack.c.h.b16 %v697
        %v1186 = vunpack.c.l.b16 %v698
        %v1187 = vunpack.c.l.b16 %v699
        %v1188 = vunpack.c.h.b16 %v699
        %v1189 = vunpack.c.l.b16 %v700
        %v1190 = vunpack.c.l.b16 %v701
        %v1191 = vunpack.c.h.b16 %v701
        %v1192 = vunpack.c.l.b16 %v702
        %v1193 = vunpack.c.l.b16 %v703
        %v1194 = vunpack.c.h.b16 %v703
        %v1195 = vunpack.c.l.b16 %v704
        %v1196 = vunpack.c.l.b16 %v705
        %v1197 = vunpack.c.h.b16 %v705
        %v1198 = vunpack.c.l.b16 %v706
        %v1199 = vunpack.c.l.b16 %v707
        %v1200 = vunpack.c.h.b16 %v707
        %v1201 = vunpack.c.l.b16 %v708
        %v1202 = vunpack.c.l.b16 %v709
        %v1203 = vunpack.c.h.b16 %v709
        %v1204 = vunpack.c.l.b16 %v710
        %v1205 = vunpack.c.l.b16 %v711
        %v1206 = vunpack.c.h.b16 %v711
        %v1207 = vunpack.c.l.b16 %v712
        %v1208 = vunpack.c.l.b16 %v713
        %v1209 = vunpack.c.h.b16 %v713
        %v1210 = vunpack.c.l.b16 %v714
        %v1211 = vunpack.c.l.b16 %v715
        %v1212 = vunpack.c.h.b16 %v715
        %v1213 = vunpack.c.l.b16 %v716
        %v1214 = vunpack.c.l.b16 %v717
        %v1215 = vunpack.c.h.b16 %v717
        %v1216 = vunpack.c.l.b16 %v718
        %v1217 = vunpack.c.l.b16 %v719
        %v1218 = vunpack.c.h.b16 %v719
        %v1219 = vunpack.c.l.b16 %v720
        %v1220 = vunpack.c.l.b16 %v721
        %v1221 = vunpack.c.h.b16 %v721
        %v1222 = vunpack.c.l.b16 %v722
        %v1223 = vunpack.c.l.b16 %v723
        %v1224 = vunpack.c.h.b16 %v723
        %v1225 = vunpack.c.l.b16 %v724
        %v1226 = vunpack.c.l.b16 %v725
        %v1227 = vunpack.c.h.b16 %v725
        %v1228 = vunpack.c.l.b16 %v726
        %v1229 = vunpack.c.l.b16 %v727
        %v1230 = vunpack.c.h.b16 %v727
        %v1231 = vunpack.c.l.b16 %v728
        %v1232 = vunpack.c.l.b16 %v729
        %v1233 = vunpack.c.h.b16 %v729
        %v1234 = vunpack.c.l.b16 %v730
        %v1235 = vunpack.c.l.b16 %v731
        %v1236 = vunpack.c.h.b16 %v731
        %v1237 = vunpack.c.l.b16 %v732
        %v1238 = vunpack.c.l.b16 %v733
        %v1239 = vunpack.c.h.b16 %v733
        %v1240 = vunpack.c.l.b16 %v734
        %v1241 = vunpack.c.l.b16 %v735
        %v1242 = vunpack.c.h.b16 %v735
        %v1243 = vunpack.c.l.b16 %v736
        %v1244 = vunpack.c.l.b16 %v737
        %v1245 = vunpack.c.h.b16 %v737
        %v1246 = vunpack.c.l.b16 %v738
        %v1247 = vunpack.c.l.b16 %v739
        %v1248 = vunpack.c.h.b16 %v739
        %v1249 = vunpack.c.l.b16 %v740
        %v1250 = vunpack.c.l.b16 %v741
        %v1251 = vunpack.c.h.b16 %v741
        %v1252 = vunpack.c.l.b16 %v742
        %v1253 = vunpack.c.l.b16 %v743
        %v1254 = vunpack.c.h.b16 %v743
        %v1255 = vunpack.c.l.b16 %v744
        %v1256 = vunpack.c.l.b16 %v745
        %v1257 = vunpack.c.h.b16 %v745
        %v1258 = vunpack.c.l.b16 %v746
        %v1259 = vunpack.c.l.b16 %v747
        %v1260 = vunpack.c.h.b16 %v747
        %v1261 = vunpack.c.l.b16 %v748
        %v1262 = vunpack.c.l.b16 %v749
        %v1263 = vunpack.c.h.b16 %v749
        %v1264 = vunpack.c.l.b16 %v750
        %v1265 = vunpack.c.l.b16 %v751
        %v1266 = vunpack.c.h.b16 %v751
        %v1267 = vunpack.c.l.b16 %v752
        %v1268 = vunpack.c.l.b16 %v753
        %v1269 = vunpack.c.h.b16 %v753
        %v1270 = vunpack.c.l.b16 %v754
        %v1271 = vunpack.c.l.b16 %v755
        %v1272 = vunpack.c.h.b16 %v755
        %v1273 = vunpack.c.l.b16 %v756
        %v1274 = vunpack.c.l.b16 %v757
        %v1275 = vunpack.c.h.b16 %v757
        %v1276 = vunpack.c.l.b16 %v758
        %v1277 = vunpack.c.l.b16 %v759
        %v1278 = vunpack.c.h.b16 %v759
        %v1279 = vunpack.c.l.b16 %v760
        %v1280 = vunpack.c.l.b16 %v761
        %v1281 = vunpack.c.h.b16 %v761
        %v1282 = vunpack.c.l.b16 %v762
        %v1283 = vunpack.c.l.b16 %v763
        %v1284 = vunpack.c.h.b16 %v763
        %v1285 = vunpack.c.l.b16 %v764
        %v1286 = vunpack.c.l.b16 %v765
        %v1287 = vunpack.c.h.b16 %v765
        %v1288 = vunpack.c.l.b16 %v766
        %v1289 = vpack.c.b16 %v1100, %v1097
        %v1290 = vpack.c.b16 %v1101, %v1098
        %v1291 = vpack.c.b16 %v1102, %v1099
        %v1292 = vpack.c.b16 %v1106, %v1103
        %v1293 = vpack.c.b16 %v1107, %v1104
        %v1294 = vpack.c.b16 %v1108, %v1105
        %v1295 = vpack.c.b16 %v1112, %v1109
        %v1296 = vpack.c.b16 %v1113, %v1110
        %v1297 = vpack.c.b16 %v1114, %v1111
        %v1298 = vpack.c.b16 %v1118, %v1115
        %v1299 = vpack.c.b16 %v1119, %v1116
        %v1300 = vpack.c.b16 %v1120, %v1117
        %v1301 = vpack.c.b16 %v1124, %v1121
        %v1302 = vpack.c.b16 %v1125, %v1122
        %v1303 = vpack.c.b16 %v1126, %v1123
        %v1304 = vpack.c.b16 %v1130, %v1127
        %v1305 = vpack.c.b16 %v1131, %v1128
        %v1306 = vpack.c.b16 %v1132, %v1129
        %v1307 = vpack.c.b16 %v1136, %v1133
        %v1308 = vpack.c.b16 %v1137, %v1134
        %v1309 = vpack.c.b16 %v1138, %v1135
        %v1310 = vpack.c.b16 %v1142, %v1139
        %v1311 = vpack.c.b16 %v1143, %v1140
        %v1312 = vpack.c.b16 %v1144, %v1141
        %v1313 = vpack.c.b16 %v1148, %v1145
        %v1314 = vpack.c.b16 %v1149, %v1146
        %v1315 = vpack.c.b16 %v1150, %v1147
        %v1316 = vpack.c.b16 %v1154, %v1151
        %v1317 = vpack.c.b16 %v1155, %v1152
        %v1318 = vpack.c.b16 %v1156, %v1153
        %v1319 = vpack.c.b16 %v1160, %v1157
        %v1320 = vpack.c.b16 %v1161, %v1158
        %v1321 = vpack.c.b16 %v1162, %v1159
        %v1322 = vpack.c.b16 %v1166, %v1163
        %v1323 = vpack.c.b16 %v1167, %v1164
        %v1324 = vpack.c.b16 %v1168, %v1165
        %v1325 = vpack.c.b16 %v1172, %v1169
        %v1326 = vpack.c.b16 %v1173, %v1170
        %v1327 = vpack.c.b16 %v1174, %v1171
        %v1328 = vpack.c.b16 %v1178, %v1175
        %v1329 = vpack.c.b16 %v1179, %v1176
        %v1330 = vpack.c.b16 %v1180, %v1177
        %v1331 = vpack.c.b16 %v1184, %v1181
        %v1332 = vpack.c.b16 %v1185, %v1182
        %v1333 = vpack.c.b16 %v1186, %v1183
        %v1334 = vpack.c.b16 %v1190, %v1187
        %v1335 = vpack.c.b16 %v1191, %v1188
        %v1336 = vpack.c.b16 %v1192, %v1189
        %v1337 = vpack.c.b16 %v1196, %v1193
        %v1338 = vpack.c.b16 %v1197, %v1194
        %v1339 = vpack.c.b16 %v1198, %v1195
        %v1340 = vpack.c.b16 %v1202, %v1199
        %v1341 = vpack.c.b16 %v1203, %v1200
        %v1342 = vpack.c.b16 %v1204, %v1201
        %v1343 = vpack.c.b16 %v1208, %v1205
        %v1344 = vpack.c.b16 %v1209, %v1206
        %v1345 = vpack.c.b16 %v1210, %v1207
        %v1346 = vpack.c.b16 %v1214, %v1211
        %v1347 = vpack.c.b16 %v1215, %v1212
        %v1348 = vpack.c.b16 %v1216, %v1213
        %v1349 = vpack.c.b16 %v1220, %v1217
        %v1350 = vpack.c.b16 %v1221, %v1218
        %v1351 = vpack.c.b16 %v1222, %v1219
        %v1352 = vpack.c.b16 %v1226, %v1223
        %v1353 = vpack.c.b16 %v1227, %v1224
        %v1354 = vpack.c.b16 %v1228, %v1225
        %v1355 = vpack.c.b16 %v1232, %v1229
        %v1356 = vpack.c.b16 %v1233, %v1230
        %v1357 = vpack.c.b16 %v1234, %v1231
        %v1358 = vpack.c.b16 %v1238, %v1235
        %v1359 = vpack.c.b16 %v1239, %v1236
        %v1360 = vpack.c.b16 %v1240, %v1237
        %v1361 = vpack.c.b16 %v1244, %v1241
        %v1362 = vpack.c.b16 %v1245, %v1242
        %v1363 = vpack.c.b16 %v1246, %v1243
        %v1364 = vpack.c.b16 %v1250, %v1247
        %v1365 = vpack.c.b16 %v1251, %v1248
        %v1366 = vpack.c.b16 %v1252, %v1249
        %v1367 = vpack.c.b16 %v1256, %v1253
        %v1368 = vpack.c.b16 %v1257, %v1254
        %v1369 = vpack.c.b16 %v1258, %v1255
        %v1370 = vpack.c.b16 %v1262, %v1259
        %v1371 = vpack.c.b16 %v1263, %v1260
        %v1372 = vpack.c.b16 %v1264, %v1261
        %v1373 = vpack.c.b16 %v1268, %v1265
        %v1374 = vpack.c.b16 %v1269, %v1266
        %v1375 = vpack.c.b16 %v1270, %v1267
        %v1376 = vpack.c.b16 %v1274, %v1271
        %v1377 = vpack.c.b16 %v1275, %v1272
        %v1378 = vpack.c.b16 %v1276, %v1273
        %v1379 = vpack.c.b16 %v1280, %v1277
        %v1380 = vpack.c.b16 %v1281, %v1278
        %v1381 = vpack.c.b16 %v1282, %v1279
        %v1382 = vpack.c.b16 %v1286, %v1283
        %v1383 = vpack.c.b16 %v1287, %v1284
        %v1384 = vpack.c.b16 %v1288, %v1285
        %1481 = vmatpush.bf16.msra.mxu0 %v1310
        %1482 = vmatpush.bf16.msra.mxu0 %v1307
        %1483 = vmatpush.bf16.msra.mxu0 %v1304
        %1484 = vmatpush.bf16.msra.mxu0 %v1301
        %1485 = vmatpush.bf16.msra.mxu0 %v1298
        %1486 = vmatpush.bf16.msra.mxu0 %v1295
        %1487 = vmatpush.bf16.msra.mxu0 %v1292
        %1488 = vmatpush.bf16.msra.mxu0 %v1289
        %1489 = vmatmul.bf16.gmra.mxu0 %v635
        %v1490 = vpop.f32.mrf.mxu0
        %v1491 = vadd.f32 %v937, %v1490
        %v1492 = vpop.f32.mrf.mxu0
        %v1493 = vadd.f32 %v939, %v1492
        %1494 = vdwg.mxu0
        %1495 = vmatpush.bf16.msra.mxu0 %v1334
        %1496 = vmatpush.bf16.msra.mxu0 %v1331
        %1497 = vmatpush.bf16.msra.mxu0 %v1328
        %1498 = vmatpush.bf16.msra.mxu0 %v1325
        %1499 = vmatpush.bf16.msra.mxu0 %v1322
        %1500 = vmatpush.bf16.msra.mxu0 %v1319
        %1501 = vmatpush.bf16.msra.mxu0 %v1316
        %1502 = vmatpush.bf16.msra.mxu0 %v1313
        %1503 = vmatmul.bf16.gmra.mxu0 %v636
        %v1504 = vpop.f32.mrf.mxu0
        %v1505 = vadd.f32 %v1491, %v1504
        %v1506 = vpop.f32.mrf.mxu0
        %v1507 = vadd.f32 %v1493, %v1506
        %1508 = vdwg.mxu0
        %1509 = vmatpush.bf16.msra.mxu0 %v1358
        %1510 = vmatpush.bf16.msra.mxu0 %v1355
        %1511 = vmatpush.bf16.msra.mxu0 %v1352
        %1512 = vmatpush.bf16.msra.mxu0 %v1349
        %1513 = vmatpush.bf16.msra.mxu0 %v1346
        %1514 = vmatpush.bf16.msra.mxu0 %v1343
        %1515 = vmatpush.bf16.msra.mxu0 %v1340
        %1516 = vmatpush.bf16.msra.mxu0 %v1337
        %1517 = vmatmul.bf16.gmra.mxu0 %v637
        %v1518 = vpop.f32.mrf.mxu0
        %v1519 = vadd.f32 %v1505, %v1518
        %v1520 = vpop.f32.mrf.mxu0
        %v1521 = vadd.f32 %v1507, %v1520
        %1522 = vdwg.mxu0
        %1523 = vmatpush.bf16.msra.mxu0 %v1382
        %1524 = vmatpush.bf16.msra.mxu0 %v1379
        %1525 = vmatpush.bf16.msra.mxu0 %v1376
        %1526 = vmatpush.bf16.msra.mxu0 %v1373
        %1527 = vmatpush.bf16.msra.mxu0 %v1370
        %1528 = vmatpush.bf16.msra.mxu0 %v1367
        %1529 = vmatpush.bf16.msra.mxu0 %v1364
        %1530 = vmatpush.bf16.msra.mxu0 %v1361
        %1531 = vmatmul.bf16.gmra.mxu0 %v638
        %v1532 = vpop.f32.mrf.mxu0
        %v1533 = vadd.f32 %v1519, %v1532
        %v1534 = vpop.f32.mrf.mxu0
        %v1535 = vadd.f32 %v1521, %v1534
        %1536 = vdwg.mxu0
        %1537 = vmatpush.bf16.msra.mxu0 %v1311
        %1538 = vmatpush.bf16.msra.mxu0 %v1308
        %1539 = vmatpush.bf16.msra.mxu0 %v1305
        %1540 = vmatpush.bf16.msra.mxu0 %v1302
        %1541 = vmatpush.bf16.msra.mxu0 %v1299
        %1542 = vmatpush.bf16.msra.mxu0 %v1296
        %1543 = vmatpush.bf16.msra.mxu0 %v1293
        %1544 = vmatpush.bf16.msra.mxu0 %v1290
        %1545 = vmatmul.bf16.gmra.mxu0 %v635
        %v1546 = vpop.f32.mrf.mxu0
        %v1547 = vadd.f32 %v951, %v1546
        %v1548 = vpop.f32.mrf.mxu0
        %v1549 = vadd.f32 %v953, %v1548
        %1550 = vdwg.mxu0
        %1551 = vmatpush.bf16.msra.mxu0 %v1335
        %1552 = vmatpush.bf16.msra.mxu0 %v1332
        %1553 = vmatpush.bf16.msra.mxu0 %v1329
        %1554 = vmatpush.bf16.msra.mxu0 %v1326
        %1555 = vmatpush.bf16.msra.mxu0 %v1323
        %1556 = vmatpush.bf16.msra.mxu0 %v1320
        %1557 = vmatpush.bf16.msra.mxu0 %v1317
        %1558 = vmatpush.bf16.msra.mxu0 %v1314
        %1559 = vmatmul.bf16.gmra.mxu0 %v636
        %v1560 = vpop.f32.mrf.mxu0
        %v1561 = vadd.f32 %v1547, %v1560
        %v1562 = vpop.f32.mrf.mxu0
        %v1563 = vadd.f32 %v1549, %v1562
        %1564 = vdwg.mxu0
        %1565 = vmatpush.bf16.msra.mxu0 %v1359
        %1566 = vmatpush.bf16.msra.mxu0 %v1356
        %1567 = vmatpush.bf16.msra.mxu0 %v1353
        %1568 = vmatpush.bf16.msra.mxu0 %v1350
        %1569 = vmatpush.bf16.msra.mxu0 %v1347
        %1570 = vmatpush.bf16.msra.mxu0 %v1344
        %1571 = vmatpush.bf16.msra.mxu0 %v1341
        %1572 = vmatpush.bf16.msra.mxu0 %v1338
        %1573 = vmatmul.bf16.gmra.mxu0 %v637
        %v1574 = vpop.f32.mrf.mxu0
        %v1575 = vadd.f32 %v1561, %v1574
        %v1576 = vpop.f32.mrf.mxu0
        %v1577 = vadd.f32 %v1563, %v1576
        %1578 = vdwg.mxu0
        %1579 = vmatpush.bf16.msra.mxu0 %v1383
        %1580 = vmatpush.bf16.msra.mxu0 %v1380
        %1581 = vmatpush.bf16.msra.mxu0 %v1377
        %1582 = vmatpush.bf16.msra.mxu0 %v1374
        %1583 = vmatpush.bf16.msra.mxu0 %v1371
        %1584 = vmatpush.bf16.msra.mxu0 %v1368
        %1585 = vmatpush.bf16.msra.mxu0 %v1365
        %1586 = vmatpush.bf16.msra.mxu0 %v1362
        %1587 = vmatmul.bf16.gmra.mxu0 %v638
        %v1588 = vpop.f32.mrf.mxu0
        %v1589 = vadd.f32 %v1575, %v1588
        %v1590 = vpop.f32.mrf.mxu0
        %v1591 = vadd.f32 %v1577, %v1590
        %1592 = vdwg.mxu0
        %1593 = vmatpush.bf16.msra.mxu0 %v1312
        %1594 = vmatpush.bf16.msra.mxu0 %v1309
        %1595 = vmatpush.bf16.msra.mxu0 %v1306
        %1596 = vmatpush.bf16.msra.mxu0 %v1303
        %1597 = vmatpush.bf16.msra.mxu0 %v1300
        %1598 = vmatpush.bf16.msra.mxu0 %v1297
        %1599 = vmatpush.bf16.msra.mxu0 %v1294
        %1600 = vmatpush.bf16.msra.mxu0 %v1291
        %1601 = vmatmul.bf16.gmra.mxu0 %v635
        %v1602 = vpop.f32.mrf.mxu0
        %v1603 = vadd.f32 %v965, %v1602
        %v1604 = vpop.f32.mrf.mxu0
        %v1605 = vadd.f32 %v967, %v1604
        %1606 = vdwg.mxu0
        %1607 = vmatpush.bf16.msra.mxu0 %v1336
        %1608 = vmatpush.bf16.msra.mxu0 %v1333
        %1609 = vmatpush.bf16.msra.mxu0 %v1330
        %1610 = vmatpush.bf16.msra.mxu0 %v1327
        %1611 = vmatpush.bf16.msra.mxu0 %v1324
        %1612 = vmatpush.bf16.msra.mxu0 %v1321
        %1613 = vmatpush.bf16.msra.mxu0 %v1318
        %1614 = vmatpush.bf16.msra.mxu0 %v1315
        %1615 = vmatmul.bf16.gmra.mxu0 %v636
        %v1616 = vpop.f32.mrf.mxu0
        %v1617 = vadd.f32 %v1603, %v1616
        %v1618 = vpop.f32.mrf.mxu0
        %v1619 = vadd.f32 %v1605, %v1618
        %1620 = vdwg.mxu0
        %1621 = vmatpush.bf16.msra.mxu0 %v1360
        %1622 = vmatpush.bf16.msra.mxu0 %v1357
        %1623 = vmatpush.bf16.msra.mxu0 %v1354
        %1624 = vmatpush.bf16.msra.mxu0 %v1351
        %1625 = vmatpush.bf16.msra.mxu0 %v1348
        %1626 = vmatpush.bf16.msra.mxu0 %v1345
        %1627 = vmatpush.bf16.msra.mxu0 %v1342
        %1628 = vmatpush.bf16.msra.mxu0 %v1339
        %1629 = vmatmul.bf16.gmra.mxu0 %v637
        %v1630 = vpop.f32.mrf.mxu0
        %v1631 = vadd.f32 %v1617, %v1630
        %v1632 = vpop.f32.mrf.mxu0
        %v1633 = vadd.f32 %v1619, %v1632
        %1634 = vdwg.mxu0
        %1635 = vmatpush.bf16.msra.mxu0 %v1384
        %1636 = vmatpush.bf16.msra.mxu0 %v1381
        %1637 = vmatpush.bf16.msra.mxu0 %v1378
        %1638 = vmatpush.bf16.msra.mxu0 %v1375
        %1639 = vmatpush.bf16.msra.mxu0 %v1372
        %1640 = vmatpush.bf16.msra.mxu0 %v1369
        %1641 = vmatpush.bf16.msra.mxu0 %v1366
        %1642 = vmatpush.bf16.msra.mxu0 %v1363
        %1643 = vmatmul.bf16.gmra.mxu0 %v638
        %v1644 = vpop.f32.mrf.mxu0
        %v1645 = vadd.f32 %v1631, %v1644
        %v1646 = vpop.f32.mrf.mxu0
        %v1647 = vadd.f32 %v1633, %v1646
        %1648 = vdwg.mxu0
        %v1649 = vld [vmem:[%s5] sm:$0x7]
        %v1651 = vperm.slane %v1649, 0
        %v1652 = vperm.slane %v1649, 1
        %v1653 = vperm.slane %v1649, 2
        %v1657 = vadd.f32 %v1533, %v1651
        %v1658 = vadd.f32 %v1589, %v1652
        %v1659 = vadd.f32 %v1645, %v1653
        %v1660 = vadd.f32 %v1535, %v1651
        %v1661 = vadd.f32 %v1591, %v1652
        %v1662 = vadd.f32 %v1647, %v1653
        %v1663 = vmax.f32 %v1657, 0.0
        %v1664 = vmax.f32 %v1658, 0.0
        %v1665 = vmax.f32 %v1659, 0.0
        %v1666 = vmax.f32 %v1660, 0.0
        %v1667 = vmax.f32 %v1661, 0.0
        %v1668 = vmax.f32 %v1662, 0.0
        %v1669 = vld [vmem:[%s6] sm:$0x7]
        %v1671 = vperm.slane %v1669, 0
        %v1672 = vperm.slane %v1669, 1
        %v1673 = vperm.slane %v1669, 2
        %v1677 = vmul.f32 %v1663, %v1671
        %v1678 = vmul.f32 %v1664, %v1672
        %v1679 = vmul.f32 %v1665, %v1673
        %v1680 = vmul.f32 %v1666, %v1671
        %v1681 = vmul.f32 %v1667, %v1672
        %v1682 = vmul.f32 %v1668, %v1673
        %v1683 = vadd.f32 %v1677, %v1678
        %v1684 = vadd.f32 %v1683, %v1679
        %1685 = vadd.xlane.f32.xlu0 %v1684
        %v1686 = vpop.xlane.xlu0 %1685
        %v1687 = vadd.f32 %v1680, %v1681
        %v1688 = vadd.f32 %v1687, %v1682
        %1689 = vadd.xlane.f32.xlu0 %v1688
        %v1690 = vpop.xlane.xlu0 %1689
        %v1691 = vld [vmem:[#allocation2] sm:$0x1]
        %v1693 = vperm.slane %v1691, 0
        %v1695 = vadd.f32 %v1686, %v1693
        %v1696 = vadd.f32 %v1690, %v1693
        %vm1697 = vcmask 7168
        %1698 = vst.msk [vmem:[%s359] sm:$0xff] %vm1697, %v1695
        %1699 = vst.msk [vmem:[%s359 + $0x8] sm:$0xff] %vm1697, %v1696
        %s1700 = smul.u32 2, %s23
        %p1701 = scmp.lt.s32.totalorder %s1700, 3
        %s1702 = scalar_select %p1701, %s1700, 3
        %s1703 = smul.addr %s1702, 8
        %s1704 = scalar_lea.vmem %s8, %s1703
        // Predicated region
        $region65: #{critic_forward.1} parent=51 // pred_check
          %p1705 = pneg %p214
        $region66: #{critic_forward.1} parent=51 // pred_check_branch
          %1707 = sbr.rel (%p1705) target = $region68
        $region67: #{critic_forward.1} parent=51 // pred_region
          %s1708 = smul.u32 2, %s23
        $region68: #{critic_forward.1} parent=51 // pred_fallthru
          _
      $region52: #{critic_forward.1} parent=5 // pred_fallthru
        _
      %p1709 = scmp.le.s32.totalorder 2, %s18
      // Predicated region
      $region69: #{critic_forward.1} parent=5 // pred_check
        %p1710 = pneg %p1709
      $region70: #{critic_forward.1} parent=5 // pred_check_branch
        %1712 = sbr.rel (%p1710) target = $region72
      $region71: #{critic_forward.1} parent=5 // pred_region
        %s1713 = ssub.s32 %s18, 2
        // Predicated region
        $region73: #{critic_forward.1} parent=71 // pred_check
          %p1714 = pneg %p220
        $region74: #{critic_forward.1} parent=71 // pred_check_branch
          %1716 = sbr.rel (%p1714) target = $region76
        $region75: #{critic_forward.1} parent=71 // pred_region
          %s1717 = smul.u32 2, %s24
          %p1718 = scmp.lt.s32.totalorder %s1717, 3
          %s1719 = scalar_select %p1718, %s1717, 3
          %s1720 = smul.addr %s1719, 8
          %s1721 = scalar_lea.vmem %s8, %s1720
        $region76: #{critic_forward.1} parent=71 // pred_fallthru
          _
      $region72: #{critic_forward.1} parent=5 // pred_fallthru
        _
    $region6: #{critic_forward.1} parent=1 // loop_footer
      %s22 = sadd.s32 1, %s18
    $region7: #{critic_forward.1} parent=1 // loop_footer_branch
      %17 = sbr.rel target = $region3
    $region8: #{critic_forward.1} parent=1 // loop_exit
      _
    %1722 = vsyncpa [#allocation4], 1
    %s1723 = scalar_lea.sflag [#allocation4], 1
    %1724 = vsyncpa %s1723, 1
    %1725 = vsyncpa [#allocation6], 1

</llo_original>
